<compile_context>
chip_gen: v7x
topology: tpu7x:2x2x1
jax: 0.10.0
libtpu: 0.0.40
codegen_flags: <defaults>
</compile_context>

<pallas_src>
import functools

import jax
import jax.numpy as jnp
from jax import lax
from jax.experimental import pallas as pl
from jax.experimental.pallas import tpu as pltpu


def _pad_lanes(x, width):
    """Zero-pad the last (lane) dim of a value up to `width` (trace-time static)."""
    n = width - x.shape[-1]
    if n == 0:
        return x
    return jnp.concatenate(
        [x, jnp.zeros(x.shape[:-1] + (n,), x.dtype)], axis=-1)


def _pd_block_kernel(ft_ref, fi_ref,
                     wqp_ref, bqp_ref, wkv_ref, bkv_ref, wf_ref, bf_ref,
                     out_ref,
                     k_scr, v_scr,
                     *, dp, tk, n_kv, unroll):
    cdtype = wqp_ref.dtype          # MXU operand dtype (bf16 by default)
    cp = wqp_ref.shape[0]           # lane-padded channel width (weights' axis 0)

    # ---- K/V projections: once per batch (qi == 0), cached in VMEM scratch.
    #      Relies on the qi grid axis being "arbitrary" (sequential per batch)
    #      -- do NOT flip it to "parallel" or stale scratch is read.
    @pl.when(pl.program_id(1) == 0)
    def _():
        fi = _pad_lanes(fi_ref[0], cp)                               # (N, Cp)
        kv = jnp.dot(fi, wkv_ref[...],
                     preferred_element_type=jnp.float32) + bkv_ref[...]
        k_scr[...] = kv[:, :dp].astype(k_scr.dtype)                  # 128-aligned split
        v_scr[...] = kv[:, dp:].astype(v_scr.dtype)

    # ---- fused Q / feat_t_proj projection for this query tile.
    #      1/sqrt(hidden_dim) is already folded into wq / bq.
    ft = _pad_lanes(ft_ref[0], cp)                                   # (TQ, Cp)
    qp = jnp.dot(ft, wqp_ref[...],
                 preferred_element_type=jnp.float32) + bqp_ref[...]  # (TQ, 2Dp)
    q = qp[:, :dp].astype(cdtype)                                    # (TQ, Dp)
    proj = qp[:, dp:]                                                # (TQ, Dp) f32
    tq = q.shape[0]

    # ---- online-softmax attention over KV tiles (flash style).
    def body(ki, carry):
        m, l, acc = carry
        start = pl.multiple_of(ki * tk, tk)
        k_blk = k_scr[pl.ds(start, tk), :]                           # (TK, Dp)
        v_blk = v_scr[pl.ds(start, tk), :]                           # (TK, Dp)
        # NT matmul: contract last dims of both operands -> no k transpose.
        s = lax.dot_general(q, k_blk, (((1,), (1,)), ((), ())),
                            preferred_element_type=jnp.float32)      # (TQ, TK)
        m_new = jnp.maximum(m, jnp.max(s, axis=-1, keepdims=True))
        alpha = jnp.exp(m - m_new)
        p = jnp.exp(s - m_new)
        l_new = alpha * l + jnp.sum(p, axis=-1, keepdims=True)
        acc_new = alpha * acc + jnp.dot(p.astype(cdtype), v_blk,
                                        preferred_element_type=jnp.float32)
        return m_new, l_new, acc_new

    m0 = jnp.full((tq, 1), -jnp.inf, dtype=jnp.float32)
    l0 = jnp.zeros((tq, 1), dtype=jnp.float32)
    acc0 = jnp.zeros((tq, dp), dtype=jnp.float32)
    m, l, acc = lax.fori_loop(0, n_kv, body, (m0, l0, acc0), unroll=unroll)

    fused = acc * pl.reciprocal(l, approx=True)                      # (TQ, Dp)

    # ---- fusion 1x1 conv on (attention + feat_t_proj); output at true Cin.
    h = (fused + proj).astype(cdtype)
    out = jnp.dot(h, wf_ref[...],
                  preferred_element_type=jnp.float32) + bf_ref[...]  # (TQ, Cin)
    out_ref[0] = out.astype(out_ref.dtype)


def _pad_axis(x, axis, mult):
    pad = (-x.shape[axis]) % mult
    if pad == 0:
        return x
    widths = [(0, 0)] * x.ndim
    widths[axis] = (0, pad)
    return jnp.pad(x, widths)


def _pick_unroll(n_kv):
    if n_kv <= 8:
        return True            # full unroll: short loops get full LLO visibility
    for u in (4, 2):           # partial unroll (2-4) -- must divide n_kv
        if n_kv % u == 0:
            return u
    return 1


def _vmem_limit_bytes(N, Cin, Dp, tile_q, tile_k, cbytes, obytes, lane=128):
    cin_l = Cin + ((-Cin) % lane)            # lane-padded VMEM footprint of tokens
    fi_buf = 2 * N * cin_l * cbytes          # fi block (double-buffered)
    ft_buf = 2 * tile_q * cin_l * cbytes
    out_buf = 2 * tile_q * cin_l * obytes
    w_buf = 2 * (2 * (cin_l * 2 * Dp) * cbytes + Dp * cin_l * cbytes
                 + 2 * (8 * 2 * Dp) * 4 + 8 * cin_l * 4)
    kv_scr = 2 * N * Dp * cbytes
    # in-kernel temporaries: s/p tiles, acc/proj, padded fi, f32 kv projection
    work = (4 * tile_q * tile_k * 4 + 6 * tile_q * Dp * 4
            + N * cin_l * cbytes + 2 * N * 2 * Dp * 4)
    est = fi_buf + ft_buf + out_buf + w_buf + kv_scr + work
    est = int(est * 1.5) + (8 << 20)         # headroom for Mosaic internal scratch
    return max(16 << 20, min(est, 100 << 20))


def pd_block(feat_t, feat_i, params, *, hidden_dim=None,
             tile_q=128, tile_k=256, lane=128,
             compute_dtype=jnp.bfloat16, out_dtype=jnp.float32):
    """feat_t, feat_i: [B, N, Cin] tokens (N = H*W).  Returns [B, N, Cin]."""
    B, N, Cin = feat_t.shape
    D = params["wq"].shape[1]
    if hidden_dim is None:
        hidden_dim = D
    scale = float(1.0 / (hidden_dim ** 0.5))

    tile_q = min(tile_q, N)
    tile_k = min(tile_k, N)
    # TODO(synk): pad + mask N (softmax -inf on padded keys) for spatial sizes
    # that don't divide the tiles (e.g. 14x14); demo shapes divide evenly.
    assert N % tile_q == 0 and N % tile_k == 0, "N must divide tile_q/tile_k"

    # Tokens stay at their true channel width in HBM (no padding) and are cast
    # once to the bf16 MXU operand dtype (halves HBM read traffic vs f32).
    ft = feat_t.astype(compute_dtype)
    fi = feat_i.astype(compute_dtype)

    # Only the (tiny) weights are padded: input-channel dim -> Cp (lane
    # multiple, matched by an in-kernel zero-pad of the tokens) and hidden dim
    # -> Dp.  Padded K/V/P columns are zero and padded wf rows are zero, so
    # the math stays exact.
    Cp = Cin + ((-Cin) % lane)
    Dp = D + ((-D) % lane)

    def prep_w(w):                                     # (Cin, D) -> (Cp, Dp)
        return _pad_axis(_pad_axis(w, 1, lane), 0, lane)

    def prep_b(b):                                     # (1, D) -> (1, Dp)
        return _pad_axis(b, 1, lane)

    # Fused projection weights: Q|P and K|V -> one 2*Dp-wide matmul each
    # (fills the 256-wide MXU on v6e/v7x).  Attention scale folded into wq/bq.
    wqp = jnp.concatenate([prep_w(params["wq"]) * scale,
                           prep_w(params["wp"])], axis=1).astype(compute_dtype)
    bqp = jnp.concatenate([prep_b(params["bq"]) * scale,
                           prep_b(params["bp"])], axis=1).astype(jnp.float32)
    wkv = jnp.concatenate([prep_w(params["wk"]),
                           prep_w(params["wv"])], axis=1).astype(compute_dtype)
    bkv = jnp.concatenate([prep_b(params["bk"]),
                           prep_b(params["bv"])], axis=1).astype(jnp.float32)
    wf = _pad_axis(params["wf"], 0, lane).astype(compute_dtype)   # (Dp, Cin)
    bf = params["bf"].astype(jnp.float32)                         # (1, Cin)

    n_kv = N // tile_k
    kernel = functools.partial(_pd_block_kernel, dp=Dp, tk=tile_k,
                               n_kv=n_kv, unroll=_pick_unroll(n_kv))

    cbytes = jnp.dtype(compute_dtype).itemsize
    obytes = jnp.dtype(out_dtype).itemsize

    in_specs = [
        pl.BlockSpec((1, tile_q, Cin), lambda b, qi: (b, qi, 0)),   # feat_t tile
        pl.BlockSpec((1, N, Cin), lambda b, qi: (b, 0, 0)),         # feat_i (per batch)
        pl.BlockSpec((Cp, 2 * Dp), lambda b, qi: (0, 0)),           # wq|wp (scaled)
        pl.BlockSpec((1, 2 * Dp), lambda b, qi: (0, 0)),            # bq|bp
        pl.BlockSpec((Cp, 2 * Dp), lambda b, qi: (0, 0)),           # wk|wv
        pl.BlockSpec((1, 2 * Dp), lambda b, qi: (0, 0)),            # bk|bv
        pl.BlockSpec((Dp, Cin), lambda b, qi: (0, 0)),              # wf
        pl.BlockSpec((1, Cin), lambda b, qi: (0, 0)),               # bf
    ]
    out_spec = pl.BlockSpec((1, tile_q, Cin), lambda b, qi: (b, qi, 0))

    out = pl.pallas_call(
        kernel,
        out_shape=jax.ShapeDtypeStruct((B, N, Cin), out_dtype),
        grid_spec=pltpu.PrefetchScalarGridSpec(
            num_scalar_prefetch=0,
            grid=(B, N // tile_q),
            in_specs=in_specs,
            out_specs=out_spec,
            scratch_shapes=[
                pltpu.VMEM((N, Dp), compute_dtype),   # cached K (per batch)
                pltpu.VMEM((N, Dp), compute_dtype),   # cached V (per batch)
            ],
        ),
        compiler_params=pltpu.CompilerParams(
            # Batch axis "parallel" (megacore).  qi MUST stay "arbitrary":
            # the K/V scratch is filled at qi == 0 of each batch.
            # TODO(synk): on v7x with B < num TensorCores, precompute K/V
            # outside the kernel (so qi can be parallel) or add an explicit
            # core axis; for very large N stream K/V tiles from an HBM
            # scratch with make_async_copy instead of (N, Dp) VMEM scratch.
            dimension_semantics=("parallel", "arbitrary"),
            vmem_limit_bytes=_vmem_limit_bytes(N, Cin, Dp, tile_q, tile_k,
                                               cbytes, obytes, lane),
        ),
    )(ft, fi, wqp, bqp, wkv, bkv, wf, bf)

    return out


def pd_block_reference(feat_t, feat_i, params, hidden_dim):
    """Pure-JAX reference mirroring the PyTorch forward (for verification)."""
    def proj(x, w, b):
        return jnp.einsum("bnc,cd->bnd", x, w) + b
    q = proj(feat_t, params["wq"], params["bq"])
    k = proj(feat_i, params["wk"], params["bk"])
    v = proj(feat_i, params["wv"], params["bv"])
    attn = jnp.einsum("bnd,bmd->bnm", q, k) / jnp.sqrt(jnp.float32(hidden_dim))
    attn = jax.nn.softmax(attn, axis=-1)
    fused = jnp.einsum("bnm,bmd->bnd", attn, v)
    p = proj(feat_t, params["wp"], params["bp"])
    return jnp.einsum("bnd,dc->bnc", fused + p, params["wf"]) + params["bf"]


def make_params(key, in_channels, hidden_dim):
    ks = jax.random.split(key, 10)

    def w(k, shape, fan_in):
        return (jax.random.uniform(k, shape, jnp.float32, -1.0, 1.0)
                / jnp.sqrt(jnp.float32(fan_in)))

    return {
        "wq": w(ks[0], (in_channels, hidden_dim), in_channels),
        "bq": w(ks[1], (1, hidden_dim), in_channels),
        "wk": w(ks[2], (in_channels, hidden_dim), in_channels),
        "bk": w(ks[3], (1, hidden_dim), in_channels),
        "wv": w(ks[4], (in_channels, hidden_dim), in_channels),
        "bv": w(ks[5], (1, hidden_dim), in_channels),
        "wp": w(ks[6], (in_channels, hidden_dim), in_channels),
        "bp": w(ks[7], (1, hidden_dim), in_channels),
        "wf": w(ks[8], (hidden_dim, in_channels), hidden_dim),
        "bf": w(ks[9], (1, in_channels), hidden_dim),
    }


def _round_bf16(x):
    return x.astype(jnp.bfloat16).astype(jnp.float32)


if __name__ == "__main__":
    B, C, H, W = 2, 4, 16, 16
    hidden_dim = 32
    N = H * W

    key = jax.random.PRNGKey(0)
    k_t, k_i, k_p = jax.random.split(key, 3)

    # NCHW inputs (as the PyTorch module expects) ...
    feat_t_nchw = jax.random.normal(k_t, (B, C, H, W), jnp.float32)
    feat_i_nchw = jax.random.normal(k_i, (B, C, H, W), jnp.float32)

    # ... flattened to the kernel layout [B, N, C]
    feat_t = feat_t_nchw.reshape(B, C, N).transpose(0, 2, 1)
    feat_i = feat_i_nchw.reshape(B, C, N).transpose(0, 2, 1)

    params = make_params(k_p, C, hidden_dim)

    # Reference in f32 on bf16-rounded operands (kernel uses bf16 MXU
    # operands with f32 accumulation + approx reciprocal + scale folded into
    # bf16 wq), hence the loosened tolerance.
    params_ref = {k: _round_bf16(params[k]) for k in ("wq", "wk", "wv", "wp", "wf")}
    params_ref.update({k: params[k] for k in ("bq", "bk", "bv", "bp", "bf")})
    ref = pd_block_reference(_round_bf16(feat_t), _round_bf16(feat_i),
                             params_ref, hidden_dim)

    # tile_k=256 default (v6e/v7x-friendly; single KV tile at this N) ...
    out_a = pd_block(feat_t, feat_i, params, hidden_dim=hidden_dim)
    # ... and tile_k=128 (v5e native tile; exercises the multi-tile online softmax).
    out_b = pd_block(feat_t, feat_i, params, hidden_dim=hidden_dim,
                     tile_q=128, tile_k=128)
    out_a, out_b = jax.block_until_ready((out_a, out_b))

    assert out_a.shape == (B, N, C) and out_b.shape == (B, N, C)
    assert jnp.allclose(out_a, ref, rtol=4e-2, atol=4e-2), "mismatch (tile_k=256)"
    assert jnp.allclose(out_b, ref, rtol=4e-2, atol=4e-2), "mismatch (tile_k=128)"

    # out is [B, N, C]; reshape back to NCHW if desired:
    _ = out_a.transpose(0, 2, 1).reshape(B, C, H, W)

    print("KERNEL_OK")
</pallas_src>

<mosaic_0001>
module attributes {stable_mosaic.version = 11 : i64} {
  func.func @_pd_block_kernel(%arg0: i32, %arg1: i32, %arg2: memref<1x128x4xbf16, #tpu.memory_space<vmem>>, %arg3: memref<1x256x4xbf16, #tpu.memory_space<vmem>>, %arg4: memref<128x256xbf16, #tpu.memory_space<vmem>>, %arg5: memref<1x256xf32, #tpu.memory_space<vmem>>, %arg6: memref<128x256xbf16, #tpu.memory_space<vmem>>, %arg7: memref<1x256xf32, #tpu.memory_space<vmem>>, %arg8: memref<128x4xbf16, #tpu.memory_space<vmem>>, %arg9: memref<1x4xf32, #tpu.memory_space<vmem>>, %arg10: memref<1x128x4xf32, #tpu.memory_space<vmem>>, %arg11: memref<256x128xbf16, #tpu.memory_space<vmem>>, %arg12: memref<256x128xbf16, #tpu.memory_space<vmem>>) attributes {dimension_semantics = [#tpu.dimension_semantics<parallel>, #tpu.dimension_semantics<arbitrary>], iteration_bounds = array<i64: 2, 2>, scalar_prefetch = 0 : i64, scratch_operands = 2 : i64, tpu.core_type = #tpu.core_type<tc>, window_params = [{transform_indices = @transform_0, window_bounds = array<i64: 1, 128, 4>}, {transform_indices = @transform_1, window_bounds = array<i64: 1, 256, 4>}, {pipeline_mode = #tpu.pipeline_mode<synchronous>, transform_indices = @transform_2, window_bounds = array<i64: 128, 256>}, {pipeline_mode = #tpu.pipeline_mode<synchronous>, transform_indices = @transform_3, window_bounds = array<i64: 1, 256>}, {pipeline_mode = #tpu.pipeline_mode<synchronous>, transform_indices = @transform_4, window_bounds = array<i64: 128, 256>}, {pipeline_mode = #tpu.pipeline_mode<synchronous>, transform_indices = @transform_5, window_bounds = array<i64: 1, 256>}, {pipeline_mode = #tpu.pipeline_mode<synchronous>, transform_indices = @transform_6, window_bounds = array<i64: 128, 4>}, {pipeline_mode = #tpu.pipeline_mode<synchronous>, transform_indices = @transform_7, window_bounds = array<i64: 1, 4>}, {transform_indices = @transform_8, window_bounds = array<i64: 1, 128, 4>}]} {
    %c0_i32 = arith.constant 0 : i32
    %0 = arith.cmpi eq, %arg1, %c0_i32 : i32
    %1 = arith.extui %0 : i1 to i32
    %c0_i32_0 = arith.constant 0 : i32
    %2 = arith.cmpi ne, %1, %c0_i32_0 : i32
    scf.if %2 {
      %c0_26 = arith.constant 0 : index
      %c0_27 = arith.constant 0 : index
      %c0_28 = arith.constant 0 : index
      %55 = vector.load %arg3[%c0_26, %c0_27, %c0_28] : memref<1x256x4xbf16, #tpu.memory_space<vmem>>, vector<1x256x4xbf16>
      %56 = vector.shape_cast %55 : vector<1x256x4xbf16> to vector<256x4xbf16>
      %cst_29 = arith.constant 0.000000e+00 : bf16
      %57 = vector.broadcast %cst_29 : bf16 to vector<256x124xbf16>
      %58 = tpu.concatenate %56, %57 in 1 : vector<256x4xbf16>, vector<256x124xbf16> -> vector<256x128xbf16>
      %c0_30 = arith.constant 0 : index
      %c0_31 = arith.constant 0 : index
      %59 = vector.load %arg6[%c0_30, %c0_31] : memref<128x256xbf16, #tpu.memory_space<vmem>>, vector<128x256xbf16>
      %cst_32 = arith.constant dense<0.000000e+00> : vector<256x256xf32>
      %60 = tpu.matmul %58, %59, %cst_32 {dimension_numbers = #tpu.dot_dimension_numbers<[1], [0], [0], [1], [0, 0, 1, 1], [], []>} : vector<256x128xbf16>, vector<128x256xbf16>, vector<256x256xf32> -> vector<256x256xf32>
      %c0_33 = arith.constant 0 : index
      %c0_34 = arith.constant 0 : index
      %61 = vector.load %arg7[%c0_33, %c0_34] : memref<1x256xf32, #tpu.memory_space<vmem>>, vector<1x256xf32>
      %62 = vector.broadcast %61 : vector<1x256xf32> to vector<256x256xf32>
      %63 = arith.addf %60, %62 : vector<256x256xf32>
      %64 = vector.extract_strided_slice %63 {offsets = [0, 0], sizes = [256, 128], strides = [1, 1]} : vector<256x256xf32> to vector<256x128xf32>
      %65 = arith.truncf %64 : vector<256x128xf32> to vector<256x128xbf16>
      %c0_35 = arith.constant 0 : index
      %c0_36 = arith.constant 0 : index
      %66 = vector.load %arg11[%c0_35, %c0_36] : memref<256x128xbf16, #tpu.memory_space<vmem>>, vector<256x128xbf16>
      tpu.vector_store %arg11[%c0_35, %c0_36], %65 {strides = array<i32>} : memref<256x128xbf16, #tpu.memory_space<vmem>>, vector<256x128xbf16>,
      %67 = vector.extract_strided_slice %63 {offsets = [0, 128], sizes = [256, 128], strides = [1, 1]} : vector<256x256xf32> to vector<256x128xf32>
      %68 = arith.truncf %67 : vector<256x128xf32> to vector<256x128xbf16>
      %c0_37 = arith.constant 0 : index
      %c0_38 = arith.constant 0 : index
      %69 = vector.load %arg12[%c0_37, %c0_38] : memref<256x128xbf16, #tpu.memory_space<vmem>>, vector<256x128xbf16>
      tpu.vector_store %arg12[%c0_37, %c0_38], %68 {strides = array<i32>} : memref<256x128xbf16, #tpu.memory_space<vmem>>, vector<256x128xbf16>,
    } else {
    }
    %c0 = arith.constant 0 : index
    %c0_1 = arith.constant 0 : index
    %c0_2 = arith.constant 0 : index
    %3 = vector.load %arg2[%c0, %c0_1, %c0_2] : memref<1x128x4xbf16, #tpu.memory_space<vmem>>, vector<1x128x4xbf16>
    %4 = vector.shape_cast %3 : vector<1x128x4xbf16> to vector<128x4xbf16>
    %cst = arith.constant 0.000000e+00 : bf16
    %5 = vector.broadcast %cst : bf16 to vector<128x124xbf16>
    %6 = tpu.concatenate %4, %5 in 1 : vector<128x4xbf16>, vector<128x124xbf16> -> vector<128x128xbf16>
    %c0_3 = arith.constant 0 : index
    %c0_4 = arith.constant 0 : index
    %7 = vector.load %arg4[%c0_3, %c0_4] : memref<128x256xbf16, #tpu.memory_space<vmem>>, vector<128x256xbf16>
    %cst_5 = arith.constant dense<0.000000e+00> : vector<128x256xf32>
    %8 = tpu.matmul %6, %7, %cst_5 {dimension_numbers = #tpu.dot_dimension_numbers<[1], [0], [0], [1], [0, 0, 1, 1], [], []>} : vector<128x128xbf16>, vector<128x256xbf16>, vector<128x256xf32> -> vector<128x256xf32>
    %c0_6 = arith.constant 0 : index
    %c0_7 = arith.constant 0 : index
    %9 = vector.load %arg5[%c0_6, %c0_7] : memref<1x256xf32, #tpu.memory_space<vmem>>, vector<1x256xf32>
    %10 = vector.broadcast %9 : vector<1x256xf32> to vector<128x256xf32>
    %11 = arith.addf %8, %10 : vector<128x256xf32>
    %12 = vector.extract_strided_slice %11 {offsets = [0, 0], sizes = [128, 128], strides = [1, 1]} : vector<128x256xf32> to vector<128x128xf32>
    %13 = arith.truncf %12 : vector<128x128xf32> to vector<128x128xbf16>
    %14 = vector.extract_strided_slice %11 {offsets = [0, 128], sizes = [128, 128], strides = [1, 1]} : vector<128x256xf32> to vector<128x128xf32>
    %cst_8 = arith.constant 0xFF800000 : f32
    %15 = vector.broadcast %cst_8 : f32 to vector<128x1xf32>
    %cst_9 = arith.constant 0.000000e+00 : f32
    %16 = vector.broadcast %cst_9 : f32 to vector<128x1xf32>
    %cst_10 = arith.constant 0.000000e+00 : f32
    %17 = vector.broadcast %cst_10 : f32 to vector<128x128xf32>
    %c0_i32_11 = arith.constant 0 : i32
    %c256_i32 = arith.constant 256 : i32
    %18 = arith.muli %c0_i32_11, %c256_i32 : i32
    %19 = tpu.assume_multiple %18, 256 : i32
    %20 = arith.index_cast %19 : i32 to index
    %c0_12 = arith.constant 0 : index
    %21 = vector.load %arg11[%20, %c0_12] : memref<256x128xbf16, #tpu.memory_space<vmem>>, vector<256x128xbf16>
    %22 = arith.index_cast %19 : i32 to index
    %c0_13 = arith.constant 0 : index
    %23 = vector.load %arg12[%22, %c0_13] : memref<256x128xbf16, #tpu.memory_space<vmem>>, vector<256x128xbf16>
    %cst_14 = arith.constant dense<0.000000e+00> : vector<128x256xf32>
    %24 = tpu.matmul %13, %21, %cst_14 {dimension_numbers = #tpu.dot_dimension_numbers<[1], [1], [0], [0], [0, 0, 1, 0], [], []>} : vector<128x128xbf16>, vector<256x128xbf16>, vector<128x256xf32> -> vector<128x256xf32>
    %cst_15 = arith.constant dense<0xFF800000> : vector<128xf32>
    %25 = vector.multi_reduction <maximumf>, %24, %cst_15 [1] : vector<128x256xf32> to vector<128xf32>
    %26 = vector.shape_cast %25 : vector<128xf32> to vector<128x1xf32>
    %27 = arith.maximumf %15, %26 : vector<128x1xf32>
    %28 = arith.subf %15, %27 : vector<128x1xf32>
    %29 = math.exp %28 : vector<128x1xf32>
    %30 = vector.broadcast %27 : vector<128x1xf32> to vector<128x256xf32>
    %31 = arith.subf %24, %30 : vector<128x256xf32>
    %32 = math.exp %31 : vector<128x256xf32>
    %33 = arith.mulf %29, %16 : vector<128x1xf32>
    %cst_16 = arith.constant dense<0.000000e+00> : vector<128xf32>
    %34 = vector.multi_reduction <add>, %32, %cst_16 [1] : vector<128x256xf32> to vector<128xf32>
    %35 = vector.shape_cast %34 : vector<128xf32> to vector<128x1xf32>
    %36 = arith.addf %33, %35 : vector<128x1xf32>
    %37 = vector.broadcast %29 : vector<128x1xf32> to vector<128x128xf32>
    %38 = arith.mulf %37, %17 : vector<128x128xf32>
    %39 = arith.truncf %32 : vector<128x256xf32> to vector<128x256xbf16>
    %cst_17 = arith.constant dense<0.000000e+00> : vector<128x128xf32>
    %40 = tpu.matmul %39, %23, %cst_17 {dimension_numbers = #tpu.dot_dimension_numbers<[1], [0], [0], [1], [0, 0, 1, 1], [], []>} : vector<128x256xbf16>, vector<256x128xbf16>, vector<128x128xf32> -> vector<128x128xf32>
    %41 = arith.addf %38, %40 : vector<128x128xf32>
    %c1_i32 = arith.constant 1 : i32
    %42 = tpu.reciprocal %36 {approx = true} : vector<128x1xf32> -> vector<128x1xf32>
    %43 = vector.broadcast %42 : vector<128x1xf32> to vector<128x128xf32>
    %44 = arith.mulf %41, %43 : vector<128x128xf32>
    %45 = arith.addf %44, %14 : vector<128x128xf32>
    %46 = arith.truncf %45 : vector<128x128xf32> to vector<128x128xbf16>
    %c0_18 = arith.constant 0 : index
    %c0_19 = arith.constant 0 : index
    %47 = vector.load %arg8[%c0_18, %c0_19] : memref<128x4xbf16, #tpu.memory_space<vmem>>, vector<128x4xbf16>
    %cst_20 = arith.constant dense<0.000000e+00> : vector<128x4xf32>
    %48 = tpu.matmul %46, %47, %cst_20 {dimension_numbers = #tpu.dot_dimension_numbers<[1], [0], [0], [1], [0, 0, 1, 1], [], []>} : vector<128x128xbf16>, vector<128x4xbf16>, vector<128x4xf32> -> vector<128x4xf32>
    %c0_21 = arith.constant 0 : index
    %c0_22 = arith.constant 0 : index
    %49 = vector.load %arg9[%c0_21, %c0_22] : memref<1x4xf32, #tpu.memory_space<vmem>>, vector<1x4xf32>
    %50 = vector.broadcast %49 : vector<1x4xf32> to vector<128x4xf32>
    %51 = arith.addf %48, %50 : vector<128x4xf32>
    %c0_23 = arith.constant 0 : index
    %c0_24 = arith.constant 0 : index
    %c0_25 = arith.constant 0 : index
    %52 = vector.load %arg10[%c0_23, %c0_24, %c0_25] : memref<1x128x4xf32, #tpu.memory_space<vmem>>, vector<1x128x4xf32>
    %53 = vector.shape_cast %52 : vector<1x128x4xf32> to vector<128x4xf32>
    %54 = vector.shape_cast %51 : vector<128x4xf32> to vector<1x128x4xf32>
    tpu.vector_store %arg10[%c0_23, %c0_24, %c0_25], %54 {strides = array<i32>} : memref<1x128x4xf32, #tpu.memory_space<vmem>>, vector<1x128x4xf32>,
    return
  }
  func.func @transform_0(%arg0: i32, %arg1: i32) -> (i32, i32, i32) {
    %c0_i32 = arith.constant 0 : i32
    %c0_i32_0 = arith.constant 0 : i32
    return %arg0, %arg1, %c0_i32 : i32, i32, i32
  }
  func.func @transform_1(%arg0: i32, %arg1: i32) -> (i32, i32, i32) {
    %c0_i32 = arith.constant 0 : i32
    %c0_i32_0 = arith.constant 0 : i32
    %c0_i32_1 = arith.constant 0 : i32
    return %arg0, %c0_i32, %c0_i32_0 : i32, i32, i32
  }
  func.func @transform_2(%arg0: i32, %arg1: i32) -> (i32, i32) {
    %c0_i32 = arith.constant 0 : i32
    %c0_i32_0 = arith.constant 0 : i32
    %c0_i32_1 = arith.constant 0 : i32
    return %c0_i32, %c0_i32_0 : i32, i32
  }
  func.func @transform_3(%arg0: i32, %arg1: i32) -> (i32, i32) {
    %c0_i32 = arith.constant 0 : i32
    %c0_i32_0 = arith.constant 0 : i32
    %c0_i32_1 = arith.constant 0 : i32
    return %c0_i32, %c0_i32_0 : i32, i32
  }
  func.func @transform_4(%arg0: i32, %arg1: i32) -> (i32, i32) {
    %c0_i32 = arith.constant 0 : i32
    %c0_i32_0 = arith.constant 0 : i32
    %c0_i32_1 = arith.constant 0 : i32
    return %c0_i32, %c0_i32_0 : i32, i32
  }
  func.func @transform_5(%arg0: i32, %arg1: i32) -> (i32, i32) {
    %c0_i32 = arith.constant 0 : i32
    %c0_i32_0 = arith.constant 0 : i32
    %c0_i32_1 = arith.constant 0 : i32
    return %c0_i32, %c0_i32_0 : i32, i32
  }
  func.func @transform_6(%arg0: i32, %arg1: i32) -> (i32, i32) {
    %c0_i32 = arith.constant 0 : i32
    %c0_i32_0 = arith.constant 0 : i32
    %c0_i32_1 = arith.constant 0 : i32
    return %c0_i32, %c0_i32_0 : i32, i32
  }
  func.func @transform_7(%arg0: i32, %arg1: i32) -> (i32, i32) {
    %c0_i32 = arith.constant 0 : i32
    %c0_i32_0 = arith.constant 0 : i32
    %c0_i32_1 = arith.constant 0 : i32
    return %c0_i32, %c0_i32_0 : i32, i32
  }
  func.func @transform_8(%arg0: i32, %arg1: i32) -> (i32, i32, i32) {
    %c0_i32 = arith.constant 0 : i32
    %c0_i32_0 = arith.constant 0 : i32
    return %arg0, %arg1, %c0_i32 : i32, i32, i32
  }
}

</mosaic_0001>

<llo_original>
// kernel: tpu_custom_call.1
$region0: #{tpu_custom_call.1}
  #allocation0 [shape = 'u32[]', space=smem, size = 0x4, offset = 0x4, fixed_abs, tag = 'smem constant byte address 0x4 - core index']
  #allocation1 [shape = 'u32[144,128]{1,0:T(1,128)}', space=vmem, size = 0x12000, scoped, tag = 'internal scratch']
  #allocation2 [shape = 'bf16[256,128]{1,0:T(16,128)(2,1)}', space=vmem, size = 0x10000, scoped, tag = 'scratch operand']
  #allocation3 [shape = 'bf16[256,128]{1,0:T(16,128)(2,1)}', space=vmem, size = 0x10000, scoped, tag = 'scratch operand']
  %s0 = inlined_call_operand.vmem [shape: bf16[2,256,4], index: 0, kind: input, shape index: {}]
  %s1 = inlined_call_operand.vmem [shape: bf16[2,256,4], index: 1, kind: input, shape index: {}]
  %s2 = inlined_call_operand.vmem [shape: bf16[128,256], index: 2, kind: input, shape index: {}]
  %s3 = inlined_call_operand.vmem [shape: f32[1,256], index: 3, kind: input, shape index: {}]
  %s4 = inlined_call_operand.vmem [shape: bf16[128,256], index: 4, kind: input, shape index: {}]
  %s5 = inlined_call_operand.vmem [shape: f32[1,256], index: 5, kind: input, shape index: {}]
  %s6 = inlined_call_operand.vmem [shape: bf16[128,4], index: 6, kind: input, shape index: {}]
  %s7 = inlined_call_operand.vmem [shape: f32[1,4], index: 7, kind: input, shape index: {}]
  %s8 = inlined_call_operand.vmem [shape: f32[2,256,4], index: 8, kind: output, shape index: {}]
  %s9 = sld [smem:[#allocation0]]
  $region69: #{tpu_custom_call.1} parent=0
    _
  %s11 = ssub.s32 1, %s9
  %s12 = scalar_select 0, %s11, %s9
  loop: start=0, step=1, limit=6
  $region2: #{tpu_custom_call.1} parent=0 // loop_pre_header
    _
  $region3: #{tpu_custom_call.1} parent=0 // loop_header
    %s14 = sphi 0, %s18
    %p15 = scmp.ge.s32.totalorder %s14, 6
    %s21 = sphi 0, %s33
    %s22 = sphi 0, %s29
    %s23 = sphi 0, %s21
    %s24 = sphi 0, %s22
    %s25 = sphi 0, %s23
    %s26 = sphi 0, %s24
    %s38 = sphi 0, %s40
    %s41 = sphi 0, %s38
    %s42 = sphi 0, %s41
    %s58 = sphi 0, %s42
    %s64 = sphi 0, %s66
    %s67 = sphi 0, %s64
    %s68 = sphi 0, %s67
    %s84 = sphi 0, %s68
    %s88 = sphi 0, %s88
    %s90 = sphi 0, %s88
    %s91 = sphi 0, %s90
    %s105 = sphi 0, %s91
    %s109 = sphi 0, %s109
    %s111 = sphi 0, %s109
    %s112 = sphi 0, %s111
    %s126 = sphi 0, %s112
    %s130 = sphi 0, %s130
    %s132 = sphi 0, %s130
    %s133 = sphi 0, %s132
    %s147 = sphi 0, %s133
    %s151 = sphi 0, %s151
    %s153 = sphi 0, %s151
    %s154 = sphi 0, %s153
    %s168 = sphi 0, %s154
    %s172 = sphi 0, %s172
    %s174 = sphi 0, %s172
    %s175 = sphi 0, %s174
    %s189 = sphi 0, %s175
    %s193 = sphi 0, %s193
    %s195 = sphi 0, %s193
    %s196 = sphi 0, %s195
    %s210 = sphi 0, %s196
    %s218 = sphi 0, %s220
    %s221 = sphi 0, %s218
    %s222 = sphi 0, %s221
    %s238 = sphi 0, %s222
  $region4: #{tpu_custom_call.1} parent=0 // loop_header_branch
    %17 = sbr.rel (%p15) target = $region8
  $region5: #{tpu_custom_call.1} parent=0 // loop_body
    %s19 = ssub.s32 %s14, 1
    %s20 = ssub.s32 %s14, 2
    %s27 = sadd.s32 1, %s22
    %p28 = scmp.ge.s32.totalorder %s27, 2
    %s29 = scalar_select %p28, 0, %s27
    %s30 = sadd.s32 1, %s21
    %s31 = scalar_select %p28, %s30, %s21
    %p32 = scmp.ge.s32.totalorder %s31, 2
    %s33 = scalar_select %p32, 0, %s31
    %s34 = ssub.s32 %s21, %s33
    %s35 = ssub.s32 %s22, %s29
    %s36 = sor.u32 %s34, %s35
    %p37 = scmp.eq.s32.totalorder %s36, 0
    %s39 = sadd.s32 %s38, 1
    %s40 = scalar_select %p37, %s38, %s39
    %p43 = pneg %p37
    %p44 = scmp.eq.s32.totalorder %s14, 3
    %p45 = por %p43, %p44
    %p46 = scmp.ne.s32.totalorder %s38, %s41
    %p47 = scmp.eq.s32.totalorder %s14, 0
    %p48 = por %p46, %p47
    %p49 = scmp.ne.s32.totalorder %s38, %s41
    %p50 = scmp.eq.s32.totalorder %s19, 3
    %p51 = por %p49, %p50
    %p52 = scmp.ne.s32.totalorder %s41, %s42
    %p53 = scmp.eq.s32.totalorder %s19, 0
    %p54 = por %p52, %p53
    %p55 = scmp.ne.s32.totalorder %s41, %s42
    %p56 = scmp.eq.s32.totalorder %s20, 3
    %p57 = por %p55, %p56
    %p59 = scmp.ne.s32.totalorder %s42, %s58
    %p60 = scmp.eq.s32.totalorder %s20, 0
    %p61 = por %p59, %p60
    %s62 = ssub.s32 %s21, %s33
    %p63 = scmp.eq.s32.totalorder %s62, 0
    %s65 = sadd.s32 %s64, 1
    %s66 = scalar_select %p63, %s64, %s65
    %p69 = pneg %p63
    %p70 = scmp.eq.s32.totalorder %s14, 3
    %p71 = por %p69, %p70
    %p72 = scmp.ne.s32.totalorder %s64, %s67
    %p73 = scmp.eq.s32.totalorder %s14, 0
    %p74 = por %p72, %p73
    %p75 = scmp.ne.s32.totalorder %s64, %s67
    %p76 = scmp.eq.s32.totalorder %s19, 3
    %p77 = por %p75, %p76
    %p78 = scmp.ne.s32.totalorder %s67, %s68
    %p79 = scmp.eq.s32.totalorder %s19, 0
    %p80 = por %p78, %p79
    %p81 = scmp.ne.s32.totalorder %s67, %s68
    %p82 = scmp.eq.s32.totalorder %s20, 3
    %p83 = por %p81, %p82
    %p85 = scmp.ne.s32.totalorder %s68, %s84
    %p86 = scmp.eq.s32.totalorder %s20, 0
    %p87 = por %p85, %p86
    %s89 = sadd.s32 %s88, 1
    %p92 = scmp.eq.s32.totalorder %s14, 3
    %p93 = scmp.ne.s32.totalorder %s88, %s90
    %p94 = scmp.eq.s32.totalorder %s14, 0
    %p95 = por %p93, %p94
    %p96 = scmp.ne.s32.totalorder %s88, %s90
    %p97 = scmp.eq.s32.totalorder %s19, 3
    %p98 = por %p96, %p97
    %p99 = scmp.ne.s32.totalorder %s90, %s91
    %p100 = scmp.eq.s32.totalorder %s19, 0
    %p101 = por %p99, %p100
    %p102 = scmp.ne.s32.totalorder %s90, %s91
    %p103 = scmp.eq.s32.totalorder %s20, 3
    %p104 = por %p102, %p103
    %p106 = scmp.ne.s32.totalorder %s91, %s105
    %p107 = scmp.eq.s32.totalorder %s20, 0
    %p108 = por %p106, %p107
    %s110 = sadd.s32 %s109, 1
    %p113 = scmp.eq.s32.totalorder %s14, 3
    %p114 = scmp.ne.s32.totalorder %s109, %s111
    %p115 = scmp.eq.s32.totalorder %s14, 0
    %p116 = por %p114, %p115
    %p117 = scmp.ne.s32.totalorder %s109, %s111
    %p118 = scmp.eq.s32.totalorder %s19, 3
    %p119 = por %p117, %p118
    %p120 = scmp.ne.s32.totalorder %s111, %s112
    %p121 = scmp.eq.s32.totalorder %s19, 0
    %p122 = por %p120, %p121
    %p123 = scmp.ne.s32.totalorder %s111, %s112
    %p124 = scmp.eq.s32.totalorder %s20, 3
    %p125 = por %p123, %p124
    %p127 = scmp.ne.s32.totalorder %s112, %s126
    %p128 = scmp.eq.s32.totalorder %s20, 0
    %p129 = por %p127, %p128
    %s131 = sadd.s32 %s130, 1
    %p134 = scmp.eq.s32.totalorder %s14, 3
    %p135 = scmp.ne.s32.totalorder %s130, %s132
    %p136 = scmp.eq.s32.totalorder %s14, 0
    %p137 = por %p135, %p136
    %p138 = scmp.ne.s32.totalorder %s130, %s132
    %p139 = scmp.eq.s32.totalorder %s19, 3
    %p140 = por %p138, %p139
    %p141 = scmp.ne.s32.totalorder %s132, %s133
    %p142 = scmp.eq.s32.totalorder %s19, 0
    %p143 = por %p141, %p142
    %p144 = scmp.ne.s32.totalorder %s132, %s133
    %p145 = scmp.eq.s32.totalorder %s20, 3
    %p146 = por %p144, %p145
    %p148 = scmp.ne.s32.totalorder %s133, %s147
    %p149 = scmp.eq.s32.totalorder %s20, 0
    %p150 = por %p148, %p149
    %s152 = sadd.s32 %s151, 1
    %p155 = scmp.eq.s32.totalorder %s14, 3
    %p156 = scmp.ne.s32.totalorder %s151, %s153
    %p157 = scmp.eq.s32.totalorder %s14, 0
    %p158 = por %p156, %p157
    %p159 = scmp.ne.s32.totalorder %s151, %s153
    %p160 = scmp.eq.s32.totalorder %s19, 3
    %p161 = por %p159, %p160
    %p162 = scmp.ne.s32.totalorder %s153, %s154
    %p163 = scmp.eq.s32.totalorder %s19, 0
    %p164 = por %p162, %p163
    %p165 = scmp.ne.s32.totalorder %s153, %s154
    %p166 = scmp.eq.s32.totalorder %s20, 3
    %p167 = por %p165, %p166
    %p169 = scmp.ne.s32.totalorder %s154, %s168
    %p170 = scmp.eq.s32.totalorder %s20, 0
    %p171 = por %p169, %p170
    %s173 = sadd.s32 %s172, 1
    %p176 = scmp.eq.s32.totalorder %s14, 3
    %p177 = scmp.ne.s32.totalorder %s172, %s174
    %p178 = scmp.eq.s32.totalorder %s14, 0
    %p179 = por %p177, %p178
    %p180 = scmp.ne.s32.totalorder %s172, %s174
    %p181 = scmp.eq.s32.totalorder %s19, 3
    %p182 = por %p180, %p181
    %p183 = scmp.ne.s32.totalorder %s174, %s175
    %p184 = scmp.eq.s32.totalorder %s19, 0
    %p185 = por %p183, %p184
    %p186 = scmp.ne.s32.totalorder %s174, %s175
    %p187 = scmp.eq.s32.totalorder %s20, 3
    %p188 = por %p186, %p187
    %p190 = scmp.ne.s32.totalorder %s175, %s189
    %p191 = scmp.eq.s32.totalorder %s20, 0
    %p192 = por %p190, %p191
    %s194 = sadd.s32 %s193, 1
    %p197 = scmp.eq.s32.totalorder %s14, 3
    %p198 = scmp.ne.s32.totalorder %s193, %s195
    %p199 = scmp.eq.s32.totalorder %s14, 0
    %p200 = por %p198, %p199
    %p201 = scmp.ne.s32.totalorder %s193, %s195
    %p202 = scmp.eq.s32.totalorder %s19, 3
    %p203 = por %p201, %p202
    %p204 = scmp.ne.s32.totalorder %s195, %s196
    %p205 = scmp.eq.s32.totalorder %s19, 0
    %p206 = por %p204, %p205
    %p207 = scmp.ne.s32.totalorder %s195, %s196
    %p208 = scmp.eq.s32.totalorder %s20, 3
    %p209 = por %p207, %p208
    %p211 = scmp.ne.s32.totalorder %s196, %s210
    %p212 = scmp.eq.s32.totalorder %s20, 0
    %p213 = por %p211, %p212
    %s214 = ssub.s32 %s21, %s33
    %s215 = ssub.s32 %s22, %s29
    %s216 = sor.u32 %s214, %s215
    %p217 = scmp.eq.s32.totalorder %s216, 0
    %s219 = sadd.s32 %s218, 1
    %s220 = scalar_select %p217, %s218, %s219
    %p223 = pneg %p217
    %p224 = scmp.eq.s32.totalorder %s14, 3
    %p225 = por %p223, %p224
    %p226 = scmp.ne.s32.totalorder %s218, %s221
    %p227 = scmp.eq.s32.totalorder %s14, 0
    %p228 = por %p226, %p227
    %p229 = scmp.ne.s32.totalorder %s218, %s221
    %p230 = scmp.eq.s32.totalorder %s19, 3
    %p231 = por %p229, %p230
    %p232 = scmp.ne.s32.totalorder %s221, %s222
    %p233 = scmp.eq.s32.totalorder %s19, 0
    %p234 = por %p232, %p233
    %p235 = scmp.ne.s32.totalorder %s221, %s222
    %p236 = scmp.eq.s32.totalorder %s20, 3
    %p237 = por %p235, %p236
    %p239 = scmp.ne.s32.totalorder %s222, %s238
    %p240 = scmp.eq.s32.totalorder %s20, 0
    %p241 = por %p239, %p240
    %p242 = scmp.le.s32.totalorder 1, %s14
    %p243 = scmp.lt.s32.totalorder %s14, 5
    %p244 = pnand %p242, %p243
    %p245 = pneg %p244
    // Predicated region
    $region9: #{tpu_custom_call.1} parent=5 // pred_check
      _
    $region10: #{tpu_custom_call.1} parent=5 // pred_check_branch
      %247 = sbr.rel (%p244) target = $region12
    $region11: #{tpu_custom_call.1} parent=5 // pred_region
      %s248 = ssub.s32 %s14, 1
      // Predicated region
      $region13: #{tpu_custom_call.1} parent=11 // pred_check
        %p249 = pneg %p101
      $region14: #{tpu_custom_call.1} parent=11 // pred_check_branch
        %251 = sbr.rel (%p249) target = $region16
      $region15: #{tpu_custom_call.1} parent=11 // pred_region
        _
      $region16: #{tpu_custom_call.1} parent=11 // pred_fallthru
        _
      // Predicated region
      $region17: #{tpu_custom_call.1} parent=11 // pred_check
        %p252 = pneg %p122
      $region18: #{tpu_custom_call.1} parent=11 // pred_check_branch
        %254 = sbr.rel (%p252) target = $region20
      $region19: #{tpu_custom_call.1} parent=11 // pred_region
        _
      $region20: #{tpu_custom_call.1} parent=11 // pred_fallthru
        _
      // Predicated region
      $region21: #{tpu_custom_call.1} parent=11 // pred_check
        %p255 = pneg %p143
      $region22: #{tpu_custom_call.1} parent=11 // pred_check_branch
        %257 = sbr.rel (%p255) target = $region24
      $region23: #{tpu_custom_call.1} parent=11 // pred_region
        _
      $region24: #{tpu_custom_call.1} parent=11 // pred_fallthru
        _
      // Predicated region
      $region25: #{tpu_custom_call.1} parent=11 // pred_check
        %p258 = pneg %p164
      $region26: #{tpu_custom_call.1} parent=11 // pred_check_branch
        %260 = sbr.rel (%p258) target = $region28
      $region27: #{tpu_custom_call.1} parent=11 // pred_region
        _
      $region28: #{tpu_custom_call.1} parent=11 // pred_fallthru
        _
      // Predicated region
      $region29: #{tpu_custom_call.1} parent=11 // pred_check
        %p261 = pneg %p185
      $region30: #{tpu_custom_call.1} parent=11 // pred_check_branch
        %263 = sbr.rel (%p261) target = $region32
      $region31: #{tpu_custom_call.1} parent=11 // pred_region
        _
      $region32: #{tpu_custom_call.1} parent=11 // pred_fallthru
        _
      // Predicated region
      $region33: #{tpu_custom_call.1} parent=11 // pred_check
        %p264 = pneg %p206
      $region34: #{tpu_custom_call.1} parent=11 // pred_check_branch
        %266 = sbr.rel (%p264) target = $region36
      $region35: #{tpu_custom_call.1} parent=11 // pred_region
        _
      $region36: #{tpu_custom_call.1} parent=11 // pred_fallthru
        _
    $region12: #{tpu_custom_call.1} parent=5 // pred_fallthru
      _
    %p267 = scmp.lt.s32.totalorder %s14, 4
    // Predicated region
    $region37: #{tpu_custom_call.1} parent=5 // pred_check
      %p268 = pneg %p267
    $region38: #{tpu_custom_call.1} parent=5 // pred_check_branch
      %270 = sbr.rel (%p268) target = $region40
    $region39: #{tpu_custom_call.1} parent=5 // pred_region
      // Predicated region
      $region41: #{tpu_custom_call.1} parent=39 // pred_check
        %p271 = pneg %p48
      $region42: #{tpu_custom_call.1} parent=39 // pred_check_branch
        %273 = sbr.rel (%p271) target = $region44
      $region43: #{tpu_custom_call.1} parent=39 // pred_region
        %s274 = smul.u32 16, %s22
        %p275 = scmp.lt.s32.totalorder %s21, 1
        %s276 = scalar_select %p275, %s21, 1
        %p277 = scmp.lt.s32.totalorder %s274, 31
        %s278 = scalar_select %p277, %s274, 31
        %s279 = smul.addr %s276, 32
        %s280 = sadd.s32 %s278, %s279
        %s281 = smul.addr %s280, 4
        %s282 = scalar_lea.vmem %s0, %s281
        %s283 = smul.u32 16, %s22
      $region44: #{tpu_custom_call.1} parent=39 // pred_fallthru
        _
      // Predicated region
      $region45: #{tpu_custom_call.1} parent=39 // pred_check
        %p284 = pneg %p74
      $region46: #{tpu_custom_call.1} parent=39 // pred_check_branch
        %286 = sbr.rel (%p284) target = $region48
      $region47: #{tpu_custom_call.1} parent=39 // pred_region
        %p287 = scmp.lt.s32.totalorder %s21, 1
        %s288 = scalar_select %p287, %s21, 1
        %s289 = smul.addr %s288, 32
        %s290 = smul.addr %s289, 4
        %s291 = scalar_lea.vmem %s1, %s290
      $region48: #{tpu_custom_call.1} parent=39 // pred_fallthru
        _
    $region40: #{tpu_custom_call.1} parent=5 // pred_fallthru
      _
    %p292 = scmp.le.s32.totalorder 1, %s14
    %p293 = scmp.lt.s32.totalorder %s14, 5
    %p294 = pnand %p292, %p293
    %p295 = pneg %p294
    // Predicated region
    $region49: #{tpu_custom_call.1} parent=5 // pred_check
      _
    $region50: #{tpu_custom_call.1} parent=5 // pred_check_branch
      %297 = sbr.rel (%p294) target = $region52
    $region51: #{tpu_custom_call.1} parent=5 // pred_region
      %s298 = ssub.s32 %s14, 1
      %s299 = smul.u32 16, %s24
      %p300 = scmp.lt.s32.totalorder %s23, 1
      %s301 = scalar_select %p300, %s23, 1
      %p302 = scmp.lt.s32.totalorder %s299, 31
      %s303 = scalar_select %p302, %s299, 31
      %s304 = smul.addr %s301, 32
      %s305 = sadd.s32 %s303, %s304
      %s306 = smul.addr %s305, 4
      %s307 = scalar_lea.vmem %s0, %s306
      %p308 = pneg %p54
      %p309 = pneg %p51
      %p310 = scmp.lt.s32.totalorder %s23, 1
      %s311 = scalar_select %p310, %s23, 1
      %s312 = smul.addr %s311, 32
      %s313 = smul.addr %s312, 4
      %s314 = scalar_lea.vmem %s1, %s313
      %p315 = pneg %p80
      %p316 = pneg %p77
      %p317 = pneg %p101
      %p318 = pneg %p98
      %p319 = pneg %p122
      %p320 = pneg %p119
      %p321 = pneg %p143
      %p322 = pneg %p140
      %p323 = pneg %p164
      %p324 = pneg %p161
      %p325 = pneg %p185
      %p326 = pneg %p182
      %p327 = pneg %p206
      %p328 = pneg %p203
      %p329 = pneg %p234
      %p330 = pneg %p231
      %s331 = smul.u32 16, %s24
      %p332 = scmp.lt.s32.totalorder %s23, 1
      %s333 = scalar_select %p332, %s23, 1
      %p334 = scmp.lt.s32.totalorder %s331, 31
      %s335 = scalar_select %p334, %s331, 31
      %s336 = smul.addr %s333, 32
      %s337 = sadd.s32 %s335, %s336
      %s338 = smul.addr %s337, 8
      %s339 = scalar_lea.vmem %s8, %s338
      %s340 = smul.u32 16, %s24
      %p341 = scmp.lt.s32.totalorder %s23, 1
      %s342 = scalar_select %p341, %s23, 1
      %p343 = scmp.lt.s32.totalorder %s340, 31
      %s344 = scalar_select %p343, %s340, 31
      %s345 = smul.addr %s342, 32
      %s346 = sadd.s32 %s344, %s345
      %s347 = smul.addr %s346, 4
      %s348 = scalar_lea.vmem %s0, %s347
      %s349 = smul.u32 16, %s24
      %p350 = scmp.lt.s32.totalorder %s23, 1
      %s351 = scalar_select %p350, %s23, 1
      %s352 = smul.addr %s351, 32
      %s353 = smul.addr %s352, 4
      %s354 = scalar_lea.vmem %s1, %s353
      %s355 = smul.u32 16, %s24
      %p356 = scmp.lt.s32.totalorder %s23, 1
      %s357 = scalar_select %p356, %s23, 1
      %p358 = scmp.lt.s32.totalorder %s355, 31
      %s359 = scalar_select %p358, %s355, 31
      %s360 = smul.addr %s357, 32
      %s361 = sadd.s32 %s359, %s360
      %s362 = smul.addr %s361, 8
      %s363 = scalar_lea.vmem %s8, %s362
      %s364 = smul.u32 16, %s24
      %p366 = scmp.eq.s32.totalorder %s24, 0
      // Predicated region
      $region53: #{tpu_custom_call.1} parent=51 // pred_check
        %p367 = pneg %p366
      $region54: #{tpu_custom_call.1} parent=51 // pred_check_branch
        %369 = sbr.rel (%p367) target = $region56
      $region55: #{tpu_custom_call.1} parent=51 // pred_region
        %v370 = vld [vmem:[%s354] sm:$0xf]
        %v371 = vld [vmem:[%s354 + $0x4] sm:$0xf]
        %v372 = vld [vmem:[%s354 + $0x8] sm:$0xf]
        %v373 = vld [vmem:[%s354 + $0xc] sm:$0xf]
        %v374 = vld [vmem:[%s354 + $0x10] sm:$0xf]
        %v375 = vld [vmem:[%s354 + $0x14] sm:$0xf]
        %v376 = vld [vmem:[%s354 + $0x18] sm:$0xf]
        %v377 = vld [vmem:[%s354 + $0x1c] sm:$0xf]
        %v378 = vld [vmem:[%s354 + $0x20] sm:$0xf]
        %v379 = vld [vmem:[%s354 + $0x24] sm:$0xf]
        %v380 = vld [vmem:[%s354 + $0x28] sm:$0xf]
        %v381 = vld [vmem:[%s354 + $0x2c] sm:$0xf]
        %v382 = vld [vmem:[%s354 + $0x30] sm:$0xf]
        %v383 = vld [vmem:[%s354 + $0x34] sm:$0xf]
        %v384 = vld [vmem:[%s354 + $0x38] sm:$0xf]
        %v385 = vld [vmem:[%s354 + $0x3c] sm:$0xf]
        %v386 = vld [vmem:[%s354 + $0x40] sm:$0xf]
        %v387 = vld [vmem:[%s354 + $0x44] sm:$0xf]
        %v388 = vld [vmem:[%s354 + $0x48] sm:$0xf]
        %v389 = vld [vmem:[%s354 + $0x4c] sm:$0xf]
        %v390 = vld [vmem:[%s354 + $0x50] sm:$0xf]
        %v391 = vld [vmem:[%s354 + $0x54] sm:$0xf]
        %v392 = vld [vmem:[%s354 + $0x58] sm:$0xf]
        %v393 = vld [vmem:[%s354 + $0x5c] sm:$0xf]
        %v394 = vld [vmem:[%s354 + $0x60] sm:$0xf]
        %v395 = vld [vmem:[%s354 + $0x64] sm:$0xf]
        %v396 = vld [vmem:[%s354 + $0x68] sm:$0xf]
        %v397 = vld [vmem:[%s354 + $0x6c] sm:$0xf]
        %v398 = vld [vmem:[%s354 + $0x70] sm:$0xf]
        %v399 = vld [vmem:[%s354 + $0x74] sm:$0xf]
        %v400 = vld [vmem:[%s354 + $0x78] sm:$0xf]
        %v401 = vld [vmem:[%s354 + $0x7c] sm:$0xf]
        %v434 = vunpack.c.l.b16 %v370
        %v435 = vunpack.c.l.b16 %v371
        %v436 = vunpack.c.l.b16 %v372
        %v437 = vunpack.c.l.b16 %v373
        %v438 = vunpack.c.l.b16 %v374
        %v439 = vunpack.c.l.b16 %v375
        %v440 = vunpack.c.l.b16 %v376
        %v441 = vunpack.c.l.b16 %v377
        %v442 = vunpack.c.l.b16 %v378
        %v443 = vunpack.c.l.b16 %v379
        %v444 = vunpack.c.l.b16 %v380
        %v445 = vunpack.c.l.b16 %v381
        %v446 = vunpack.c.l.b16 %v382
        %v447 = vunpack.c.l.b16 %v383
        %v448 = vunpack.c.l.b16 %v384
        %v449 = vunpack.c.l.b16 %v385
        %v450 = vunpack.c.l.b16 %v386
        %v451 = vunpack.c.l.b16 %v387
        %v452 = vunpack.c.l.b16 %v388
        %v453 = vunpack.c.l.b16 %v389
        %v454 = vunpack.c.l.b16 %v390
        %v455 = vunpack.c.l.b16 %v391
        %v456 = vunpack.c.l.b16 %v392
        %v457 = vunpack.c.l.b16 %v393
        %v458 = vunpack.c.l.b16 %v394
        %v459 = vunpack.c.l.b16 %v395
        %v460 = vunpack.c.l.b16 %v396
        %v461 = vunpack.c.l.b16 %v397
        %v462 = vunpack.c.l.b16 %v398
        %v463 = vunpack.c.l.b16 %v399
        %v464 = vunpack.c.l.b16 %v400
        %v465 = vunpack.c.l.b16 %v401
        %v466 = vpack.c.b16 %v435, %v434
        %v467 = vpack.c.b16 %v437, %v436
        %v468 = vpack.c.b16 %v439, %v438
        %v469 = vpack.c.b16 %v441, %v440
        %v470 = vpack.c.b16 %v443, %v442
        %v471 = vpack.c.b16 %v445, %v444
        %v472 = vpack.c.b16 %v447, %v446
        %v473 = vpack.c.b16 %v449, %v448
        %v474 = vpack.c.b16 %v451, %v450
        %v475 = vpack.c.b16 %v453, %v452
        %v476 = vpack.c.b16 %v455, %v454
        %v477 = vpack.c.b16 %v457, %v456
        %v478 = vpack.c.b16 %v459, %v458
        %v479 = vpack.c.b16 %v461, %v460
        %v480 = vpack.c.b16 %v463, %v462
        %v481 = vpack.c.b16 %v465, %v464
        %vm482 = vcmask 31744
        %v485 = vsel %vm482, %v466, 0
        %v488 = vsel %vm482, %v467, 0
        %v491 = vsel %vm482, %v468, 0
        %v494 = vsel %vm482, %v469, 0
        %v497 = vsel %vm482, %v470, 0
        %v500 = vsel %vm482, %v471, 0
        %v503 = vsel %vm482, %v472, 0
        %v506 = vsel %vm482, %v473, 0
        %v509 = vsel %vm482, %v474, 0
        %v512 = vsel %vm482, %v475, 0
        %v515 = vsel %vm482, %v476, 0
        %v518 = vsel %vm482, %v477, 0
        %v521 = vsel %vm482, %v478, 0
        %v524 = vsel %vm482, %v479, 0
        %v527 = vsel %vm482, %v480, 0
        %v530 = vsel %vm482, %v481, 0
        %v532 = vld [vmem:[%s4] sm:$0xff]
        %v533 = vld [vmem:[%s4 + $0x8] sm:$0xff]
        %v534 = vld [vmem:[%s4 + $0x10] sm:$0xff]
        %v535 = vld [vmem:[%s4 + $0x18] sm:$0xff]
        %v536 = vld [vmem:[%s4 + $0x20] sm:$0xff]
        %v537 = vld [vmem:[%s4 + $0x28] sm:$0xff]
        %v538 = vld [vmem:[%s4 + $0x30] sm:$0xff]
        %v539 = vld [vmem:[%s4 + $0x38] sm:$0xff]
        %v540 = vld [vmem:[%s4 + $0x40] sm:$0xff]
        %v541 = vld [vmem:[%s4 + $0x48] sm:$0xff]
        %v542 = vld [vmem:[%s4 + $0x50] sm:$0xff]
        %v543 = vld [vmem:[%s4 + $0x58] sm:$0xff]
        %v544 = vld [vmem:[%s4 + $0x60] sm:$0xff]
        %v545 = vld [vmem:[%s4 + $0x68] sm:$0xff]
        %v546 = vld [vmem:[%s4 + $0x70] sm:$0xff]
        %v547 = vld [vmem:[%s4 + $0x78] sm:$0xff]
        %v548 = vld [vmem:[%s5] sm:$0x3]
        %v550 = vlaneseq
        %v551 = vshrl.u32 %v550, 7
        %v552 = vsub.s32 0, %v551
        %v553 = vrot.slane %v548, %v552
        %v554 = vlaneseq
        %v555 = vshrl.u32 %v554, 7
        %v556 = vsub.s32 1, %v555
        %v557 = vrot.slane %v548, %v556
        %v576 = vunpack.c.l.b16 %v532
        %v577 = vunpack.c.h.b16 %v532
        %v578 = vunpack.c.l.b16 %v533
        %v579 = vunpack.c.h.b16 %v533
        %v580 = vunpack.c.l.b16 %v534
        %v581 = vunpack.c.h.b16 %v534
        %v582 = vunpack.c.l.b16 %v535
        %v583 = vunpack.c.h.b16 %v535
        %v584 = vunpack.c.l.b16 %v536
        %v585 = vunpack.c.h.b16 %v536
        %v586 = vunpack.c.l.b16 %v537
        %v587 = vunpack.c.h.b16 %v537
        %v588 = vunpack.c.l.b16 %v538
        %v589 = vunpack.c.h.b16 %v538
        %v590 = vunpack.c.l.b16 %v539
        %v591 = vunpack.c.h.b16 %v539
        %v592 = vunpack.c.l.b16 %v540
        %v593 = vunpack.c.h.b16 %v540
        %v594 = vunpack.c.l.b16 %v541
        %v595 = vunpack.c.h.b16 %v541
        %v596 = vunpack.c.l.b16 %v542
        %v597 = vunpack.c.h.b16 %v542
        %v598 = vunpack.c.l.b16 %v543
        %v599 = vunpack.c.h.b16 %v543
        %v600 = vunpack.c.l.b16 %v544
        %v601 = vunpack.c.h.b16 %v544
        %v602 = vunpack.c.l.b16 %v545
        %v603 = vunpack.c.h.b16 %v545
        %v604 = vunpack.c.l.b16 %v546
        %v605 = vunpack.c.h.b16 %v546
        %v606 = vunpack.c.l.b16 %v547
        %v607 = vunpack.c.h.b16 %v547
        %v608 = vpack.c.b16 %v578, %v576
        %v609 = vpack.c.b16 %v579, %v577
        %v610 = vpack.c.b16 %v582, %v580
        %v611 = vpack.c.b16 %v583, %v581
        %v612 = vpack.c.b16 %v586, %v584
        %v613 = vpack.c.b16 %v587, %v585
        %v614 = vpack.c.b16 %v590, %v588
        %v615 = vpack.c.b16 %v591, %v589
        %v616 = vpack.c.b16 %v594, %v592
        %v617 = vpack.c.b16 %v595, %v593
        %v618 = vpack.c.b16 %v598, %v596
        %v619 = vpack.c.b16 %v599, %v597
        %v620 = vpack.c.b16 %v602, %v600
        %v621 = vpack.c.b16 %v603, %v601
        %v622 = vpack.c.b16 %v606, %v604
        %v623 = vpack.c.b16 %v607, %v605
        %640 = vmatprep.subr.bf16.mxu0 %v609
        %641 = vmatpush1.bf16.msra.mxu0 %v608
        %642 = vmatprep.subr.bf16.mxu0 %v611
        %643 = vmatpush1.bf16.msra.mxu0 %v610
        %644 = vmatprep.subr.bf16.mxu0 %v613
        %645 = vmatpush1.bf16.msra.mxu0 %v612
        %646 = vmatprep.subr.bf16.mxu0 %v615
        %647 = vmatpush1.bf16.msra.mxu0 %v614
        %648 = vmatprep.subr.bf16.mxu0 %v617
        %649 = vmatpush1.bf16.msra.mxu0 %v616
        %650 = vmatprep.subr.bf16.mxu0 %v619
        %651 = vmatpush1.bf16.msra.mxu0 %v618
        %652 = vmatprep.subr.bf16.mxu0 %v621
        %653 = vmatpush1.bf16.msra.mxu0 %v620
        %654 = vmatprep.subr.bf16.mxu0 %v623
        %655 = vmatpush1.bf16.msra.mxu0 %v622
        %656 = vmatprep.subr.bf16.mxu0 0
        %657 = vmatpush1.bf16.msra.mxu0 0
        %658 = vmatprep.subr.bf16.mxu0 0
        %659 = vmatpush1.bf16.msra.mxu0 0
        %660 = vmatprep.subr.bf16.mxu0 0
        %661 = vmatpush1.bf16.msra.mxu0 0
        %662 = vmatprep.subr.bf16.mxu0 0
        %663 = vmatpush1.bf16.msra.mxu0 0
        %664 = vmatprep.subr.bf16.mxu0 0
        %665 = vmatpush1.bf16.msra.mxu0 0
        %666 = vmatprep.subr.bf16.mxu0 0
        %667 = vmatpush1.bf16.msra.mxu0 0
        %668 = vmatprep.subr.bf16.mxu0 0
        %669 = vmatpush1.bf16.msra.mxu0 0
        %670 = vmatprep.subr.bf16.mxu0 0
        %671 = vmatpush1.bf16.msra.mxu0 0
        %672 = vmatprep.mubr.bf16.mxu0 0
        %673 = vmatmul.mubr.bf16.gmra.mrb[0].mxu0 %v485
        %v674 = vpop.f32.mrb[0].mxu0
        %v675 = vadd.f32 %v553, %v674
        %v676 = vpop.f32.mrb[0].mxu0
        %v677 = vadd.f32 %v557, %v676
        %v678 = vpop.f32.mrb[0].mxu0
        %v679 = vadd.f32 %v553, %v678
        %v680 = vpop.f32.mrb[0].mxu0
        %v681 = vadd.f32 %v557, %v680
        %682 = vmatprep.mubr.bf16.mxu0 0
        %683 = vmatmul.mubr.bf16.gmra.mrb[0].mxu0 %v488
        %v684 = vpop.f32.mrb[0].mxu0
        %v685 = vadd.f32 %v553, %v684
        %v686 = vpop.f32.mrb[0].mxu0
        %v687 = vadd.f32 %v557, %v686
        %v688 = vpop.f32.mrb[0].mxu0
        %v689 = vadd.f32 %v553, %v688
        %v690 = vpop.f32.mrb[0].mxu0
        %v691 = vadd.f32 %v557, %v690
        %692 = vmatprep.mubr.bf16.mxu0 0
        %693 = vmatmul.mubr.bf16.gmra.mrb[0].mxu0 %v491
        %v694 = vpop.f32.mrb[0].mxu0
        %v695 = vadd.f32 %v553, %v694
        %v696 = vpop.f32.mrb[0].mxu0
        %v697 = vadd.f32 %v557, %v696
        %v698 = vpop.f32.mrb[0].mxu0
        %v699 = vadd.f32 %v553, %v698
        %v700 = vpop.f32.mrb[0].mxu0
        %v701 = vadd.f32 %v557, %v700
        %702 = vmatprep.mubr.bf16.mxu0 0
        %703 = vmatmul.mubr.bf16.gmra.mrb[0].mxu0 %v494
        %v704 = vpop.f32.mrb[0].mxu0
        %v705 = vadd.f32 %v553, %v704
        %v706 = vpop.f32.mrb[0].mxu0
        %v707 = vadd.f32 %v557, %v706
        %v708 = vpop.f32.mrb[0].mxu0
        %v709 = vadd.f32 %v553, %v708
        %v710 = vpop.f32.mrb[0].mxu0
        %v711 = vadd.f32 %v557, %v710
        %712 = vmatprep.mubr.bf16.mxu0 0
        %713 = vmatmul.mubr.bf16.gmra.mrb[0].mxu0 %v497
        %v714 = vpop.f32.mrb[0].mxu0
        %v715 = vadd.f32 %v553, %v714
        %v716 = vpop.f32.mrb[0].mxu0
        %v717 = vadd.f32 %v557, %v716
        %v718 = vpop.f32.mrb[0].mxu0
        %v719 = vadd.f32 %v553, %v718
        %v720 = vpop.f32.mrb[0].mxu0
        %v721 = vadd.f32 %v557, %v720
        %722 = vmatprep.mubr.bf16.mxu0 0
        %723 = vmatmul.mubr.bf16.gmra.mrb[0].mxu0 %v500
        %v724 = vpop.f32.mrb[0].mxu0
        %v725 = vadd.f32 %v553, %v724
        %v726 = vpop.f32.mrb[0].mxu0
        %v727 = vadd.f32 %v557, %v726
        %v728 = vpop.f32.mrb[0].mxu0
        %v729 = vadd.f32 %v553, %v728
        %v730 = vpop.f32.mrb[0].mxu0
        %v731 = vadd.f32 %v557, %v730
        %732 = vmatprep.mubr.bf16.mxu0 0
        %733 = vmatmul.mubr.bf16.gmra.mrb[0].mxu0 %v503
        %v734 = vpop.f32.mrb[0].mxu0
        %v735 = vadd.f32 %v553, %v734
        %v736 = vpop.f32.mrb[0].mxu0
        %v737 = vadd.f32 %v557, %v736
        %v738 = vpop.f32.mrb[0].mxu0
        %v739 = vadd.f32 %v553, %v738
        %v740 = vpop.f32.mrb[0].mxu0
        %v741 = vadd.f32 %v557, %v740
        %742 = vmatprep.mubr.bf16.mxu0 0
        %743 = vmatmul.mubr.bf16.gmra.mrb[0].mxu0 %v506
        %v744 = vpop.f32.mrb[0].mxu0
        %v745 = vadd.f32 %v553, %v744
        %v746 = vpop.f32.mrb[0].mxu0
        %v747 = vadd.f32 %v557, %v746
        %v748 = vpop.f32.mrb[0].mxu0
        %v749 = vadd.f32 %v553, %v748
        %v750 = vpop.f32.mrb[0].mxu0
        %v751 = vadd.f32 %v557, %v750
        %752 = vmatprep.mubr.bf16.mxu0 0
        %753 = vmatmul.mubr.bf16.gmra.mrb[0].mxu0 %v509
        %v754 = vpop.f32.mrb[0].mxu0
        %v755 = vadd.f32 %v553, %v754
        %v756 = vpop.f32.mrb[0].mxu0
        %v757 = vadd.f32 %v557, %v756
        %v758 = vpop.f32.mrb[0].mxu0
        %v759 = vadd.f32 %v553, %v758
        %v760 = vpop.f32.mrb[0].mxu0
        %v761 = vadd.f32 %v557, %v760
        %762 = vmatprep.mubr.bf16.mxu0 0
        %763 = vmatmul.mubr.bf16.gmra.mrb[0].mxu0 %v512
        %v764 = vpop.f32.mrb[0].mxu0
        %v765 = vadd.f32 %v553, %v764
        %v766 = vpop.f32.mrb[0].mxu0
        %v767 = vadd.f32 %v557, %v766
        %v768 = vpop.f32.mrb[0].mxu0
        %v769 = vadd.f32 %v553, %v768
        %v770 = vpop.f32.mrb[0].mxu0
        %v771 = vadd.f32 %v557, %v770
        %772 = vmatprep.mubr.bf16.mxu0 0
        %773 = vmatmul.mubr.bf16.gmra.mrb[0].mxu0 %v515
        %v774 = vpop.f32.mrb[0].mxu0
        %v775 = vadd.f32 %v553, %v774
        %v776 = vpop.f32.mrb[0].mxu0
        %v777 = vadd.f32 %v557, %v776
        %v778 = vpop.f32.mrb[0].mxu0
        %v779 = vadd.f32 %v553, %v778
        %v780 = vpop.f32.mrb[0].mxu0
        %v781 = vadd.f32 %v557, %v780
        %782 = vmatprep.mubr.bf16.mxu0 0
        %783 = vmatmul.mubr.bf16.gmra.mrb[0].mxu0 %v518
        %v784 = vpop.f32.mrb[0].mxu0
        %v785 = vadd.f32 %v553, %v784
        %v786 = vpop.f32.mrb[0].mxu0
        %v787 = vadd.f32 %v557, %v786
        %v788 = vpop.f32.mrb[0].mxu0
        %v789 = vadd.f32 %v553, %v788
        %v790 = vpop.f32.mrb[0].mxu0
        %v791 = vadd.f32 %v557, %v790
        %792 = vmatprep.mubr.bf16.mxu0 0
        %793 = vmatmul.mubr.bf16.gmra.mrb[0].mxu0 %v521
        %v794 = vpop.f32.mrb[0].mxu0
        %v795 = vadd.f32 %v553, %v794
        %v796 = vpop.f32.mrb[0].mxu0
        %v797 = vadd.f32 %v557, %v796
        %v798 = vpop.f32.mrb[0].mxu0
        %v799 = vadd.f32 %v553, %v798
        %v800 = vpop.f32.mrb[0].mxu0
        %v801 = vadd.f32 %v557, %v800
        %802 = vmatprep.mubr.bf16.mxu0 0
        %803 = vmatmul.mubr.bf16.gmra.mrb[0].mxu0 %v524
        %v804 = vpop.f32.mrb[0].mxu0
        %v805 = vadd.f32 %v553, %v804
        %v806 = vpop.f32.mrb[0].mxu0
        %v807 = vadd.f32 %v557, %v806
        %v808 = vpop.f32.mrb[0].mxu0
        %v809 = vadd.f32 %v553, %v808
        %v810 = vpop.f32.mrb[0].mxu0
        %v811 = vadd.f32 %v557, %v810
        %812 = vmatprep.mubr.bf16.mxu0 0
        %813 = vmatmul.mubr.bf16.gmra.mrb[0].mxu0 %v527
        %v814 = vpop.f32.mrb[0].mxu0
        %v815 = vadd.f32 %v553, %v814
        %v816 = vpop.f32.mrb[0].mxu0
        %v817 = vadd.f32 %v557, %v816
        %v818 = vpop.f32.mrb[0].mxu0
        %v819 = vadd.f32 %v553, %v818
        %v820 = vpop.f32.mrb[0].mxu0
        %v821 = vadd.f32 %v557, %v820
        %822 = vmatprep.mubr.bf16.mxu0 0
        %823 = vmatmul.mubr.bf16.gmra.mrb[0].mxu0 %v530
        %v824 = vpop.f32.mrb[0].mxu0
        %v825 = vadd.f32 %v553, %v824
        %v826 = vpop.f32.mrb[0].mxu0
        %v827 = vadd.f32 %v557, %v826
        %v828 = vpop.f32.mrb[0].mxu0
        %v829 = vadd.f32 %v553, %v828
        %v830 = vpop.f32.mrb[0].mxu0
        %v831 = vadd.f32 %v557, %v830
        %832 = vdwg.mxu0
        %v833 = vpack.c.bf16 %v679, %v675
        %v834 = vpack.c.bf16 %v689, %v685
        %v835 = vpack.c.bf16 %v699, %v695
        %v836 = vpack.c.bf16 %v709, %v705
        %v837 = vpack.c.bf16 %v719, %v715
        %v838 = vpack.c.bf16 %v729, %v725
        %v839 = vpack.c.bf16 %v739, %v735
        %v840 = vpack.c.bf16 %v749, %v745
        %v841 = vpack.c.bf16 %v759, %v755
        %v842 = vpack.c.bf16 %v769, %v765
        %v843 = vpack.c.bf16 %v779, %v775
        %v844 = vpack.c.bf16 %v789, %v785
        %v845 = vpack.c.bf16 %v799, %v795
        %v846 = vpack.c.bf16 %v809, %v805
        %v847 = vpack.c.bf16 %v819, %v815
        %v848 = vpack.c.bf16 %v829, %v825
        %849 = vst [vmem:[#allocation2] sm:$0xff] %v833
        %850 = vst [vmem:[#allocation2 + $0x8] sm:$0xff] %v834
        %851 = vst [vmem:[#allocation2 + $0x10] sm:$0xff] %v835
        %852 = vst [vmem:[#allocation2 + $0x18] sm:$0xff] %v836
        %853 = vst [vmem:[#allocation2 + $0x20] sm:$0xff] %v837
        %854 = vst [vmem:[#allocation2 + $0x28] sm:$0xff] %v838
        %855 = vst [vmem:[#allocation2 + $0x30] sm:$0xff] %v839
        %856 = vst [vmem:[#allocation2 + $0x38] sm:$0xff] %v840
        %857 = vst [vmem:[#allocation2 + $0x40] sm:$0xff] %v841
        %858 = vst [vmem:[#allocation2 + $0x48] sm:$0xff] %v842
        %859 = vst [vmem:[#allocation2 + $0x50] sm:$0xff] %v843
        %860 = vst [vmem:[#allocation2 + $0x58] sm:$0xff] %v844
        %861 = vst [vmem:[#allocation2 + $0x60] sm:$0xff] %v845
        %862 = vst [vmem:[#allocation2 + $0x68] sm:$0xff] %v846
        %863 = vst [vmem:[#allocation2 + $0x70] sm:$0xff] %v847
        %864 = vst [vmem:[#allocation2 + $0x78] sm:$0xff] %v848
        %v865 = vpack.c.bf16 %v681, %v677
        %v866 = vpack.c.bf16 %v691, %v687
        %v867 = vpack.c.bf16 %v701, %v697
        %v868 = vpack.c.bf16 %v711, %v707
        %v869 = vpack.c.bf16 %v721, %v717
        %v870 = vpack.c.bf16 %v731, %v727
        %v871 = vpack.c.bf16 %v741, %v737
        %v872 = vpack.c.bf16 %v751, %v747
        %v873 = vpack.c.bf16 %v761, %v757
        %v874 = vpack.c.bf16 %v771, %v767
        %v875 = vpack.c.bf16 %v781, %v777
        %v876 = vpack.c.bf16 %v791, %v787
        %v877 = vpack.c.bf16 %v801, %v797
        %v878 = vpack.c.bf16 %v811, %v807
        %v879 = vpack.c.bf16 %v821, %v817
        %v880 = vpack.c.bf16 %v831, %v827
        %881 = vst [vmem:[#allocation3] sm:$0xff] %v865
        %882 = vst [vmem:[#allocation3 + $0x8] sm:$0xff] %v866
        %883 = vst [vmem:[#allocation3 + $0x10] sm:$0xff] %v867
        %884 = vst [vmem:[#allocation3 + $0x18] sm:$0xff] %v868
        %885 = vst [vmem:[#allocation3 + $0x20] sm:$0xff] %v869
        %886 = vst [vmem:[#allocation3 + $0x28] sm:$0xff] %v870
        %887 = vst [vmem:[#allocation3 + $0x30] sm:$0xff] %v871
        %888 = vst [vmem:[#allocation3 + $0x38] sm:$0xff] %v872
        %889 = vst [vmem:[#allocation3 + $0x40] sm:$0xff] %v873
        %890 = vst [vmem:[#allocation3 + $0x48] sm:$0xff] %v874
        %891 = vst [vmem:[#allocation3 + $0x50] sm:$0xff] %v875
        %892 = vst [vmem:[#allocation3 + $0x58] sm:$0xff] %v876
        %893 = vst [vmem:[#allocation3 + $0x60] sm:$0xff] %v877
        %894 = vst [vmem:[#allocation3 + $0x68] sm:$0xff] %v878
        %895 = vst [vmem:[#allocation3 + $0x70] sm:$0xff] %v879
        %896 = vst [vmem:[#allocation3 + $0x78] sm:$0xff] %v880
      $region56: #{tpu_custom_call.1} parent=51 // pred_fallthru
        _
      %v897 = vld [vmem:[%s348] sm:$0xf]
      %v898 = vld [vmem:[%s348 + $0x4] sm:$0xf]
      %v899 = vld [vmem:[%s348 + $0x8] sm:$0xf]
      %v900 = vld [vmem:[%s348 + $0xc] sm:$0xf]
      %v901 = vld [vmem:[%s348 + $0x10] sm:$0xf]
      %v902 = vld [vmem:[%s348 + $0x14] sm:$0xf]
      %v903 = vld [vmem:[%s348 + $0x18] sm:$0xf]
      %v904 = vld [vmem:[%s348 + $0x1c] sm:$0xf]
      %v905 = vld [vmem:[%s348 + $0x20] sm:$0xf]
      %v906 = vld [vmem:[%s348 + $0x24] sm:$0xf]
      %v907 = vld [vmem:[%s348 + $0x28] sm:$0xf]
      %v908 = vld [vmem:[%s348 + $0x2c] sm:$0xf]
      %v909 = vld [vmem:[%s348 + $0x30] sm:$0xf]
      %v910 = vld [vmem:[%s348 + $0x34] sm:$0xf]
      %v911 = vld [vmem:[%s348 + $0x38] sm:$0xf]
      %v912 = vld [vmem:[%s348 + $0x3c] sm:$0xf]
      %v929 = vunpack.c.l.b16 %v897
      %v930 = vunpack.c.l.b16 %v898
      %v931 = vunpack.c.l.b16 %v899
      %v932 = vunpack.c.l.b16 %v900
      %v933 = vunpack.c.l.b16 %v901
      %v934 = vunpack.c.l.b16 %v902
      %v935 = vunpack.c.l.b16 %v903
      %v936 = vunpack.c.l.b16 %v904
      %v937 = vunpack.c.l.b16 %v905
      %v938 = vunpack.c.l.b16 %v906
      %v939 = vunpack.c.l.b16 %v907
      %v940 = vunpack.c.l.b16 %v908
      %v941 = vunpack.c.l.b16 %v909
      %v942 = vunpack.c.l.b16 %v910
      %v943 = vunpack.c.l.b16 %v911
      %v944 = vunpack.c.l.b16 %v912
      %v945 = vpack.c.b16 %v930, %v929
      %v946 = vpack.c.b16 %v932, %v931
      %v947 = vpack.c.b16 %v934, %v933
      %v948 = vpack.c.b16 %v936, %v935
      %v949 = vpack.c.b16 %v938, %v937
      %v950 = vpack.c.b16 %v940, %v939
      %v951 = vpack.c.b16 %v942, %v941
      %v952 = vpack.c.b16 %v944, %v943
      %vm953 = vcmask 31744
      %v956 = vsel %vm953, %v945, 0
      %v959 = vsel %vm953, %v946, 0
      %v962 = vsel %vm953, %v947, 0
      %v965 = vsel %vm953, %v948, 0
      %v968 = vsel %vm953, %v949, 0
      %v971 = vsel %vm953, %v950, 0
      %v974 = vsel %vm953, %v951, 0
      %v977 = vsel %vm953, %v952, 0
      %v979 = vld [vmem:[%s2] sm:$0xff]
      %v980 = vld [vmem:[%s2 + $0x8] sm:$0xff]
      %v981 = vld [vmem:[%s2 + $0x10] sm:$0xff]
      %v982 = vld [vmem:[%s2 + $0x18] sm:$0xff]
      %v983 = vld [vmem:[%s2 + $0x20] sm:$0xff]
      %v984 = vld [vmem:[%s2 + $0x28] sm:$0xff]
      %v985 = vld [vmem:[%s2 + $0x30] sm:$0xff]
      %v986 = vld [vmem:[%s2 + $0x38] sm:$0xff]
      %v987 = vld [vmem:[%s2 + $0x40] sm:$0xff]
      %v988 = vld [vmem:[%s2 + $0x48] sm:$0xff]
      %v989 = vld [vmem:[%s2 + $0x50] sm:$0xff]
      %v990 = vld [vmem:[%s2 + $0x58] sm:$0xff]
      %v991 = vld [vmem:[%s2 + $0x60] sm:$0xff]
      %v992 = vld [vmem:[%s2 + $0x68] sm:$0xff]
      %v993 = vld [vmem:[%s2 + $0x70] sm:$0xff]
      %v994 = vld [vmem:[%s2 + $0x78] sm:$0xff]
      %v995 = vld [vmem:[%s3] sm:$0x3]
      %v997 = vlaneseq
      %v998 = vshrl.u32 %v997, 7
      %v999 = vsub.s32 0, %v998
      %v1000 = vrot.slane %v995, %v999
      %v1001 = vlaneseq
      %v1002 = vshrl.u32 %v1001, 7
      %v1003 = vsub.s32 1, %v1002
      %v1004 = vrot.slane %v995, %v1003
      %v1023 = vunpack.c.l.b16 %v979
      %v1024 = vunpack.c.h.b16 %v979
      %v1025 = vunpack.c.l.b16 %v980
      %v1026 = vunpack.c.h.b16 %v980
      %v1027 = vunpack.c.l.b16 %v981
      %v1028 = vunpack.c.h.b16 %v981
      %v1029 = vunpack.c.l.b16 %v982
      %v1030 = vunpack.c.h.b16 %v982
      %v1031 = vunpack.c.l.b16 %v983
      %v1032 = vunpack.c.h.b16 %v983
      %v1033 = vunpack.c.l.b16 %v984
      %v1034 = vunpack.c.h.b16 %v984
      %v1035 = vunpack.c.l.b16 %v985
      %v1036 = vunpack.c.h.b16 %v985
      %v1037 = vunpack.c.l.b16 %v986
      %v1038 = vunpack.c.h.b16 %v986
      %v1039 = vunpack.c.l.b16 %v987
      %v1040 = vunpack.c.h.b16 %v987
      %v1041 = vunpack.c.l.b16 %v988
      %v1042 = vunpack.c.h.b16 %v988
      %v1043 = vunpack.c.l.b16 %v989
      %v1044 = vunpack.c.h.b16 %v989
      %v1045 = vunpack.c.l.b16 %v990
      %v1046 = vunpack.c.h.b16 %v990
      %v1047 = vunpack.c.l.b16 %v991
      %v1048 = vunpack.c.h.b16 %v991
      %v1049 = vunpack.c.l.b16 %v992
      %v1050 = vunpack.c.h.b16 %v992
      %v1051 = vunpack.c.l.b16 %v993
      %v1052 = vunpack.c.h.b16 %v993
      %v1053 = vunpack.c.l.b16 %v994
      %v1054 = vunpack.c.h.b16 %v994
      %v1055 = vpack.c.b16 %v1025, %v1023
      %v1056 = vpack.c.b16 %v1026, %v1024
      %v1057 = vpack.c.b16 %v1029, %v1027
      %v1058 = vpack.c.b16 %v1030, %v1028
      %v1059 = vpack.c.b16 %v1033, %v1031
      %v1060 = vpack.c.b16 %v1034, %v1032
      %v1061 = vpack.c.b16 %v1037, %v1035
      %v1062 = vpack.c.b16 %v1038, %v1036
      %v1063 = vpack.c.b16 %v1041, %v1039
      %v1064 = vpack.c.b16 %v1042, %v1040
      %v1065 = vpack.c.b16 %v1045, %v1043
      %v1066 = vpack.c.b16 %v1046, %v1044
      %v1067 = vpack.c.b16 %v1049, %v1047
      %v1068 = vpack.c.b16 %v1050, %v1048
      %v1069 = vpack.c.b16 %v1053, %v1051
      %v1070 = vpack.c.b16 %v1054, %v1052
      %1087 = vmatprep.subr.bf16.mxu0 %v1056
      %1088 = vmatpush1.bf16.msra.mxu0 %v1055
      %1089 = vmatprep.subr.bf16.mxu0 %v1058
      %1090 = vmatpush1.bf16.msra.mxu0 %v1057
      %1091 = vmatprep.subr.bf16.mxu0 %v1060
      %1092 = vmatpush1.bf16.msra.mxu0 %v1059
      %1093 = vmatprep.subr.bf16.mxu0 %v1062
      %1094 = vmatpush1.bf16.msra.mxu0 %v1061
      %1095 = vmatprep.subr.bf16.mxu0 %v1064
      %1096 = vmatpush1.bf16.msra.mxu0 %v1063
      %1097 = vmatprep.subr.bf16.mxu0 %v1066
      %1098 = vmatpush1.bf16.msra.mxu0 %v1065
      %1099 = vmatprep.subr.bf16.mxu0 %v1068
      %1100 = vmatpush1.bf16.msra.mxu0 %v1067
      %1101 = vmatprep.subr.bf16.mxu0 %v1070
      %1102 = vmatpush1.bf16.msra.mxu0 %v1069
      %1103 = vmatprep.subr.bf16.mxu0 0
      %1104 = vmatpush1.bf16.msra.mxu0 0
      %1105 = vmatprep.subr.bf16.mxu0 0
      %1106 = vmatpush1.bf16.msra.mxu0 0
      %1107 = vmatprep.subr.bf16.mxu0 0
      %1108 = vmatpush1.bf16.msra.mxu0 0
      %1109 = vmatprep.subr.bf16.mxu0 0
      %1110 = vmatpush1.bf16.msra.mxu0 0
      %1111 = vmatprep.subr.bf16.mxu0 0
      %1112 = vmatpush1.bf16.msra.mxu0 0
      %1113 = vmatprep.subr.bf16.mxu0 0
      %1114 = vmatpush1.bf16.msra.mxu0 0
      %1115 = vmatprep.subr.bf16.mxu0 0
      %1116 = vmatpush1.bf16.msra.mxu0 0
      %1117 = vmatprep.subr.bf16.mxu0 0
      %1118 = vmatpush1.bf16.msra.mxu0 0
      %1119 = vmatprep.mubr.bf16.mxu0 0
      %1120 = vmatmul.mubr.bf16.gmra.mrb[0].mxu0 %v956
      %v1121 = vpop.f32.mrb[0].mxu0
      %v1122 = vadd.f32 %v1000, %v1121
      %v1123 = vpop.f32.mrb[0].mxu0
      %v1124 = vadd.f32 %v1004, %v1123
      %v1125 = vpop.f32.mrb[0].mxu0
      %v1126 = vadd.f32 %v1000, %v1125
      %v1127 = vpop.f32.mrb[0].mxu0
      %v1128 = vadd.f32 %v1004, %v1127
      %1129 = vmatprep.mubr.bf16.mxu0 0
      %1130 = vmatmul.mubr.bf16.gmra.mrb[0].mxu0 %v959
      %v1131 = vpop.f32.mrb[0].mxu0
      %v1132 = vadd.f32 %v1000, %v1131
      %v1133 = vpop.f32.mrb[0].mxu0
      %v1134 = vadd.f32 %v1004, %v1133
      %v1135 = vpop.f32.mrb[0].mxu0
      %v1136 = vadd.f32 %v1000, %v1135
      %v1137 = vpop.f32.mrb[0].mxu0
      %v1138 = vadd.f32 %v1004, %v1137
      %1139 = vmatprep.mubr.bf16.mxu0 0
      %1140 = vmatmul.mubr.bf16.gmra.mrb[0].mxu0 %v962
      %v1141 = vpop.f32.mrb[0].mxu0
      %v1142 = vadd.f32 %v1000, %v1141
      %v1143 = vpop.f32.mrb[0].mxu0
      %v1144 = vadd.f32 %v1004, %v1143
      %v1145 = vpop.f32.mrb[0].mxu0
      %v1146 = vadd.f32 %v1000, %v1145
      %v1147 = vpop.f32.mrb[0].mxu0
      %v1148 = vadd.f32 %v1004, %v1147
      %1149 = vmatprep.mubr.bf16.mxu0 0
      %1150 = vmatmul.mubr.bf16.gmra.mrb[0].mxu0 %v965
      %v1151 = vpop.f32.mrb[0].mxu0
      %v1152 = vadd.f32 %v1000, %v1151
      %v1153 = vpop.f32.mrb[0].mxu0
      %v1154 = vadd.f32 %v1004, %v1153
      %v1155 = vpop.f32.mrb[0].mxu0
      %v1156 = vadd.f32 %v1000, %v1155
      %v1157 = vpop.f32.mrb[0].mxu0
      %v1158 = vadd.f32 %v1004, %v1157
      %1159 = vmatprep.mubr.bf16.mxu0 0
      %1160 = vmatmul.mubr.bf16.gmra.mrb[0].mxu0 %v968
      %v1161 = vpop.f32.mrb[0].mxu0
      %v1162 = vadd.f32 %v1000, %v1161
      %v1163 = vpop.f32.mrb[0].mxu0
      %v1164 = vadd.f32 %v1004, %v1163
      %v1165 = vpop.f32.mrb[0].mxu0
      %v1166 = vadd.f32 %v1000, %v1165
      %v1167 = vpop.f32.mrb[0].mxu0
      %v1168 = vadd.f32 %v1004, %v1167
      %1169 = vmatprep.mubr.bf16.mxu0 0
      %1170 = vmatmul.mubr.bf16.gmra.mrb[0].mxu0 %v971
      %v1171 = vpop.f32.mrb[0].mxu0
      %v1172 = vadd.f32 %v1000, %v1171
      %v1173 = vpop.f32.mrb[0].mxu0
      %v1174 = vadd.f32 %v1004, %v1173
      %v1175 = vpop.f32.mrb[0].mxu0
      %v1176 = vadd.f32 %v1000, %v1175
      %v1177 = vpop.f32.mrb[0].mxu0
      %v1178 = vadd.f32 %v1004, %v1177
      %1179 = vmatprep.mubr.bf16.mxu0 0
      %1180 = vmatmul.mubr.bf16.gmra.mrb[0].mxu0 %v974
      %v1181 = vpop.f32.mrb[0].mxu0
      %v1182 = vadd.f32 %v1000, %v1181
      %v1183 = vpop.f32.mrb[0].mxu0
      %v1184 = vadd.f32 %v1004, %v1183
      %v1185 = vpop.f32.mrb[0].mxu0
      %v1186 = vadd.f32 %v1000, %v1185
      %v1187 = vpop.f32.mrb[0].mxu0
      %v1188 = vadd.f32 %v1004, %v1187
      %1189 = vmatprep.mubr.bf16.mxu0 0
      %1190 = vmatmul.mubr.bf16.gmra.mrb[0].mxu0 %v977
      %v1191 = vpop.f32.mrb[0].mxu0
      %v1192 = vadd.f32 %v1000, %v1191
      %v1193 = vpop.f32.mrb[0].mxu0
      %v1194 = vadd.f32 %v1004, %v1193
      %v1195 = vpop.f32.mrb[0].mxu0
      %v1196 = vadd.f32 %v1000, %v1195
      %v1197 = vpop.f32.mrb[0].mxu0
      %v1198 = vadd.f32 %v1004, %v1197
      %1199 = vdwg.mxu0
      %v1200 = vpack.c.bf16 %v1126, %v1122
      %v1201 = vpack.c.bf16 %v1136, %v1132
      %v1202 = vpack.c.bf16 %v1146, %v1142
      %v1203 = vpack.c.bf16 %v1156, %v1152
      %v1204 = vpack.c.bf16 %v1166, %v1162
      %v1205 = vpack.c.bf16 %v1176, %v1172
      %v1206 = vpack.c.bf16 %v1186, %v1182
      %v1207 = vpack.c.bf16 %v1196, %v1192
      %v1208 = vld [vmem:[#allocation2] sm:$0xff]
      %v1209 = vld [vmem:[#allocation2 + $0x8] sm:$0xff]
      %v1210 = vld [vmem:[#allocation2 + $0x10] sm:$0xff]
      %v1211 = vld [vmem:[#allocation2 + $0x18] sm:$0xff]
      %v1212 = vld [vmem:[#allocation2 + $0x20] sm:$0xff]
      %v1213 = vld [vmem:[#allocation2 + $0x28] sm:$0xff]
      %v1214 = vld [vmem:[#allocation2 + $0x30] sm:$0xff]
      %v1215 = vld [vmem:[#allocation2 + $0x38] sm:$0xff]
      %v1216 = vld [vmem:[#allocation2 + $0x40] sm:$0xff]
      %v1217 = vld [vmem:[#allocation2 + $0x48] sm:$0xff]
      %v1218 = vld [vmem:[#allocation2 + $0x50] sm:$0xff]
      %v1219 = vld [vmem:[#allocation2 + $0x58] sm:$0xff]
      %v1220 = vld [vmem:[#allocation2 + $0x60] sm:$0xff]
      %v1221 = vld [vmem:[#allocation2 + $0x68] sm:$0xff]
      %v1222 = vld [vmem:[#allocation2 + $0x70] sm:$0xff]
      %v1223 = vld [vmem:[#allocation2 + $0x78] sm:$0xff]
      %v1224 = vld [vmem:[#allocation3] sm:$0xff]
      %v1225 = vld [vmem:[#allocation3 + $0x8] sm:$0xff]
      %v1226 = vld [vmem:[#allocation3 + $0x10] sm:$0xff]
      %v1227 = vld [vmem:[#allocation3 + $0x18] sm:$0xff]
      %v1228 = vld [vmem:[#allocation3 + $0x20] sm:$0xff]
      %v1229 = vld [vmem:[#allocation3 + $0x28] sm:$0xff]
      %v1230 = vld [vmem:[#allocation3 + $0x30] sm:$0xff]
      %v1231 = vld [vmem:[#allocation3 + $0x38] sm:$0xff]
      %v1232 = vld [vmem:[#allocation3 + $0x40] sm:$0xff]
      %v1233 = vld [vmem:[#allocation3 + $0x48] sm:$0xff]
      %v1234 = vld [vmem:[#allocation3 + $0x50] sm:$0xff]
      %v1235 = vld [vmem:[#allocation3 + $0x58] sm:$0xff]
      %v1236 = vld [vmem:[#allocation3 + $0x60] sm:$0xff]
      %v1237 = vld [vmem:[#allocation3 + $0x68] sm:$0xff]
      %v1238 = vld [vmem:[#allocation3 + $0x70] sm:$0xff]
      %v1239 = vld [vmem:[#allocation3 + $0x78] sm:$0xff]
      %1240 = vmatprep.subr.bf16.mxu0 0
      %1241 = vmatpush1.bf16.xpose.msra.mxu0 %v1208
      %1242 = vmatprep.subr.bf16.mxu0 0
      %1243 = vmatpush1.bf16.xpose.msra.mxu0 %v1209
      %1244 = vmatprep.subr.bf16.mxu0 0
      %1245 = vmatpush1.bf16.xpose.msra.mxu0 %v1210
      %1246 = vmatprep.subr.bf16.mxu0 0
      %1247 = vmatpush1.bf16.xpose.msra.mxu0 %v1211
      %1248 = vmatprep.subr.bf16.mxu0 0
      %1249 = vmatpush1.bf16.xpose.msra.mxu0 %v1212
      %1250 = vmatprep.subr.bf16.mxu0 0
      %1251 = vmatpush1.bf16.xpose.msra.mxu0 %v1213
      %1252 = vmatprep.subr.bf16.mxu0 0
      %1253 = vmatpush1.bf16.xpose.msra.mxu0 %v1214
      %1254 = vmatprep.subr.bf16.mxu0 0
      %1255 = vmatpush1.bf16.xpose.msra.mxu0 %v1215
      %1256 = vmatprep.subr.bf16.mxu0 0
      %1257 = vmatpush1.bf16.xpose.msra.mxu0 %v1216
      %1258 = vmatprep.subr.bf16.mxu0 0
      %1259 = vmatpush1.bf16.xpose.msra.mxu0 %v1217
      %1260 = vmatprep.subr.bf16.mxu0 0
      %1261 = vmatpush1.bf16.xpose.msra.mxu0 %v1218
      %1262 = vmatprep.subr.bf16.mxu0 0
      %1263 = vmatpush1.bf16.xpose.msra.mxu0 %v1219
      %1264 = vmatprep.subr.bf16.mxu0 0
      %1265 = vmatpush1.bf16.xpose.msra.mxu0 %v1220
      %1266 = vmatprep.subr.bf16.mxu0 0
      %1267 = vmatpush1.bf16.xpose.msra.mxu0 %v1221
      %1268 = vmatprep.subr.bf16.mxu0 0
      %1269 = vmatpush1.bf16.xpose.msra.mxu0 %v1222
      %1270 = vmatprep.subr.bf16.mxu0 0
      %1271 = vmatpush1.bf16.xpose.msra.mxu0 %v1223
      %1272 = vmatprep.mubr.bf16.mxu0 0
      %1273 = vmatmul.mubr.bf16.gmra.mrb[0].mxu0 %v1200
      %v1274 = vpop.f32.mrb[0].mxu0
      %v1275 = vadd.f32 0.0, %v1274
      %v1276 = vpop.f32.mrb[0].mxu0
      %v1277 = vadd.f32 0.0, %v1276
      %v1278 = vpop.f32.mrb[0].mxu0
      %v1279 = vadd.f32 0.0, %v1278
      %v1280 = vpop.f32.mrb[0].mxu0
      %v1281 = vadd.f32 0.0, %v1280
      %1282 = vmatprep.mubr.bf16.mxu0 0
      %1283 = vmatmul.mubr.bf16.gmra.mrb[0].mxu0 %v1201
      %v1284 = vpop.f32.mrb[0].mxu0
      %v1285 = vadd.f32 0.0, %v1284
      %v1286 = vpop.f32.mrb[0].mxu0
      %v1287 = vadd.f32 0.0, %v1286
      %v1288 = vpop.f32.mrb[0].mxu0
      %v1289 = vadd.f32 0.0, %v1288
      %v1290 = vpop.f32.mrb[0].mxu0
      %v1291 = vadd.f32 0.0, %v1290
      %1292 = vmatprep.mubr.bf16.mxu0 0
      %1293 = vmatmul.mubr.bf16.gmra.mrb[0].mxu0 %v1202
      %v1294 = vpop.f32.mrb[0].mxu0
      %v1295 = vadd.f32 0.0, %v1294
      %v1296 = vpop.f32.mrb[0].mxu0
      %v1297 = vadd.f32 0.0, %v1296
      %v1298 = vpop.f32.mrb[0].mxu0
      %v1299 = vadd.f32 0.0, %v1298
      %v1300 = vpop.f32.mrb[0].mxu0
      %v1301 = vadd.f32 0.0, %v1300
      %1302 = vmatprep.mubr.bf16.mxu0 0
      %1303 = vmatmul.mubr.bf16.gmra.mrb[0].mxu0 %v1203
      %v1304 = vpop.f32.mrb[0].mxu0
      %v1305 = vadd.f32 0.0, %v1304
      %v1306 = vpop.f32.mrb[0].mxu0
      %v1307 = vadd.f32 0.0, %v1306
      %v1308 = vpop.f32.mrb[0].mxu0
      %v1309 = vadd.f32 0.0, %v1308
      %v1310 = vpop.f32.mrb[0].mxu0
      %v1311 = vadd.f32 0.0, %v1310
      %1312 = vmatprep.mubr.bf16.mxu0 0
      %1313 = vmatmul.mubr.bf16.gmra.mrb[0].mxu0 %v1204
      %v1314 = vpop.f32.mrb[0].mxu0
      %v1315 = vadd.f32 0.0, %v1314
      %v1316 = vpop.f32.mrb[0].mxu0
      %v1317 = vadd.f32 0.0, %v1316
      %v1318 = vpop.f32.mrb[0].mxu0
      %v1319 = vadd.f32 0.0, %v1318
      %v1320 = vpop.f32.mrb[0].mxu0
      %v1321 = vadd.f32 0.0, %v1320
      %1322 = vmatprep.mubr.bf16.mxu0 0
      %1323 = vmatmul.mubr.bf16.gmra.mrb[0].mxu0 %v1205
      %v1324 = vpop.f32.mrb[0].mxu0
      %v1325 = vadd.f32 0.0, %v1324
      %v1326 = vpop.f32.mrb[0].mxu0
      %v1327 = vadd.f32 0.0, %v1326
      %v1328 = vpop.f32.mrb[0].mxu0
      %v1329 = vadd.f32 0.0, %v1328
      %v1330 = vpop.f32.mrb[0].mxu0
      %v1331 = vadd.f32 0.0, %v1330
      %1332 = vmatprep.mubr.bf16.mxu0 0
      %1333 = vmatmul.mubr.bf16.gmra.mrb[0].mxu0 %v1206
      %v1334 = vpop.f32.mrb[0].mxu0
      %v1335 = vadd.f32 0.0, %v1334
      %v1336 = vpop.f32.mrb[0].mxu0
      %v1337 = vadd.f32 0.0, %v1336
      %v1338 = vpop.f32.mrb[0].mxu0
      %v1339 = vadd.f32 0.0, %v1338
      %v1340 = vpop.f32.mrb[0].mxu0
      %v1341 = vadd.f32 0.0, %v1340
      %1342 = vmatprep.mubr.bf16.mxu0 0
      %1343 = vmatmul.mubr.bf16.gmra.mrb[0].mxu0 %v1207
      %v1344 = vpop.f32.mrb[0].mxu0
      %v1345 = vadd.f32 0.0, %v1344
      %v1346 = vpop.f32.mrb[0].mxu0
      %v1347 = vadd.f32 0.0, %v1346
      %v1348 = vpop.f32.mrb[0].mxu0
      %v1349 = vadd.f32 0.0, %v1348
      %v1350 = vpop.f32.mrb[0].mxu0
      %v1351 = vadd.f32 0.0, %v1350
      %1352 = vdwg.mxu0
      %v1353 = vmax.f32 %v1275, %v1277
      %1354 = vmax.xlane.f32.xlu0 %v1353
      %v1355 = vpop.xlane.xlu0 %1354
      %v1356 = vmax.f32 %v1279, %v1281
      %1357 = vmax.xlane.f32.xlu0 %v1356
      %v1358 = vpop.xlane.xlu0 %1357
      %v1359 = vmax.f32 %v1285, %v1287
      %1360 = vmax.xlane.f32.xlu0 %v1359
      %v1361 = vpop.xlane.xlu0 %1360
      %v1362 = vmax.f32 %v1289, %v1291
      %1363 = vmax.xlane.f32.xlu0 %v1362
      %v1364 = vpop.xlane.xlu0 %1363
      %v1365 = vmax.f32 %v1295, %v1297
      %1366 = vmax.xlane.f32.xlu0 %v1365
      %v1367 = vpop.xlane.xlu0 %1366
      %v1368 = vmax.f32 %v1299, %v1301
      %1369 = vmax.xlane.f32.xlu0 %v1368
      %v1370 = vpop.xlane.xlu0 %1369
      %v1371 = vmax.f32 %v1305, %v1307
      %1372 = vmax.xlane.f32.xlu0 %v1371
      %v1373 = vpop.xlane.xlu0 %1372
      %v1374 = vmax.f32 %v1309, %v1311
      %1375 = vmax.xlane.f32.xlu0 %v1374
      %v1376 = vpop.xlane.xlu0 %1375
      %v1377 = vmax.f32 %v1315, %v1317
      %1378 = vmax.xlane.f32.xlu0 %v1377
      %v1379 = vpop.xlane.xlu0 %1378
      %v1380 = vmax.f32 %v1319, %v1321
      %1381 = vmax.xlane.f32.xlu0 %v1380
      %v1382 = vpop.xlane.xlu0 %1381
      %v1383 = vmax.f32 %v1325, %v1327
      %1384 = vmax.xlane.f32.xlu0 %v1383
      %v1385 = vpop.xlane.xlu0 %1384
      %v1386 = vmax.f32 %v1329, %v1331
      %1387 = vmax.xlane.f32.xlu0 %v1386
      %v1388 = vpop.xlane.xlu0 %1387
      %v1389 = vmax.f32 %v1335, %v1337
      %1390 = vmax.xlane.f32.xlu0 %v1389
      %v1391 = vpop.xlane.xlu0 %1390
      %v1392 = vmax.f32 %v1339, %v1341
      %1393 = vmax.xlane.f32.xlu0 %v1392
      %v1394 = vpop.xlane.xlu0 %1393
      %v1395 = vmax.f32 %v1345, %v1347
      %1396 = vmax.xlane.f32.xlu0 %v1395
      %v1397 = vpop.xlane.xlu0 %1396
      %v1398 = vmax.f32 %v1349, %v1351
      %1399 = vmax.xlane.f32.xlu0 %v1398
      %v1400 = vpop.xlane.xlu0 %1399
      %v1401 = vsub.f32 -inf, %v1355
      %v1402 = vsub.f32 -inf, %v1358
      %v1403 = vsub.f32 -inf, %v1361
      %v1404 = vsub.f32 -inf, %v1364
      %v1405 = vsub.f32 -inf, %v1367
      %v1406 = vsub.f32 -inf, %v1370
      %v1407 = vsub.f32 -inf, %v1373
      %v1408 = vsub.f32 -inf, %v1376
      %v1409 = vsub.f32 -inf, %v1379
      %v1410 = vsub.f32 -inf, %v1382
      %v1411 = vsub.f32 -inf, %v1385
      %v1412 = vsub.f32 -inf, %v1388
      %v1413 = vsub.f32 -inf, %v1391
      %v1414 = vsub.f32 -inf, %v1394
      %v1415 = vsub.f32 -inf, %v1397
      %v1416 = vsub.f32 -inf, %v1400
      %v1417 = vmul.f32 %v1401, 1.442695
      %v1418 = vpow.pop %v1417
      %v1419 = vmul.f32 %v1402, 1.442695
      %v1420 = vpow.pop %v1419
      %v1421 = vmul.f32 %v1403, 1.442695
      %v1422 = vpow.pop %v1421
      %v1423 = vmul.f32 %v1404, 1.442695
      %v1424 = vpow.pop %v1423
      %v1425 = vmul.f32 %v1405, 1.442695
      %v1426 = vpow.pop %v1425
      %v1427 = vmul.f32 %v1406, 1.442695
      %v1428 = vpow.pop %v1427
      %v1429 = vmul.f32 %v1407, 1.442695
      %v1430 = vpow.pop %v1429
      %v1431 = vmul.f32 %v1408, 1.442695
      %v1432 = vpow.pop %v1431
      %v1433 = vmul.f32 %v1409, 1.442695
      %v1434 = vpow.pop %v1433
      %v1435 = vmul.f32 %v1410, 1.442695
      %v1436 = vpow.pop %v1435
      %v1437 = vmul.f32 %v1411, 1.442695
      %v1438 = vpow.pop %v1437
      %v1439 = vmul.f32 %v1412, 1.442695
      %v1440 = vpow.pop %v1439
      %v1441 = vmul.f32 %v1413, 1.442695
      %v1442 = vpow.pop %v1441
      %v1443 = vmul.f32 %v1414, 1.442695
      %v1444 = vpow.pop %v1443
      %v1445 = vmul.f32 %v1415, 1.442695
      %v1446 = vpow.pop %v1445
      %v1447 = vmul.f32 %v1416, 1.442695
      %v1448 = vpow.pop %v1447
      %v1449 = vsub.f32 %v1275, %v1355
      %v1450 = vsub.f32 %v1277, %v1355
      %v1451 = vsub.f32 %v1279, %v1358
      %v1452 = vsub.f32 %v1281, %v1358
      %v1453 = vsub.f32 %v1285, %v1361
      %v1454 = vsub.f32 %v1287, %v1361
      %v1455 = vsub.f32 %v1289, %v1364
      %v1456 = vsub.f32 %v1291, %v1364
      %v1457 = vsub.f32 %v1295, %v1367
      %v1458 = vsub.f32 %v1297, %v1367
      %v1459 = vsub.f32 %v1299, %v1370
      %v1460 = vsub.f32 %v1301, %v1370
      %v1461 = vsub.f32 %v1305, %v1373
      %v1462 = vsub.f32 %v1307, %v1373
      %v1463 = vsub.f32 %v1309, %v1376
      %v1464 = vsub.f32 %v1311, %v1376
      %v1465 = vsub.f32 %v1315, %v1379
      %v1466 = vsub.f32 %v1317, %v1379
      %v1467 = vsub.f32 %v1319, %v1382
      %v1468 = vsub.f32 %v1321, %v1382
      %v1469 = vsub.f32 %v1325, %v1385
      %v1470 = vsub.f32 %v1327, %v1385
      %v1471 = vsub.f32 %v1329, %v1388
      %v1472 = vsub.f32 %v1331, %v1388
      %v1473 = vsub.f32 %v1335, %v1391
      %v1474 = vsub.f32 %v1337, %v1391
      %v1475 = vsub.f32 %v1339, %v1394
      %v1476 = vsub.f32 %v1341, %v1394
      %v1477 = vsub.f32 %v1345, %v1397
      %v1478 = vsub.f32 %v1347, %v1397
      %v1479 = vsub.f32 %v1349, %v1400
      %v1480 = vsub.f32 %v1351, %v1400
      %v1481 = vmul.f32 %v1449, 1.442695
      %v1482 = vpow.pop %v1481
      %v1483 = vmul.f32 %v1450, 1.442695
      %v1484 = vpow.pop %v1483
      %v1485 = vmul.f32 %v1451, 1.442695
      %v1486 = vpow.pop %v1485
      %v1487 = vmul.f32 %v1452, 1.442695
      %v1488 = vpow.pop %v1487
      %v1489 = vmul.f32 %v1453, 1.442695
      %v1490 = vpow.pop %v1489
      %v1491 = vmul.f32 %v1454, 1.442695
      %v1492 = vpow.pop %v1491
      %v1493 = vmul.f32 %v1455, 1.442695
      %v1494 = vpow.pop %v1493
      %v1495 = vmul.f32 %v1456, 1.442695
      %v1496 = vpow.pop %v1495
      %v1497 = vmul.f32 %v1457, 1.442695
      %v1498 = vpow.pop %v1497
      %v1499 = vmul.f32 %v1458, 1.442695
      %v1500 = vpow.pop %v1499
      %v1501 = vmul.f32 %v1459, 1.442695
      %v1502 = vpow.pop %v1501
      %v1503 = vmul.f32 %v1460, 1.442695
      %v1504 = vpow.pop %v1503
      %v1505 = vmul.f32 %v1461, 1.442695
      %v1506 = vpow.pop %v1505
      %v1507 = vmul.f32 %v1462, 1.442695
      %v1508 = vpow.pop %v1507
      %v1509 = vmul.f32 %v1463, 1.442695
      %v1510 = vpow.pop %v1509
      %v1511 = vmul.f32 %v1464, 1.442695
      %v1512 = vpow.pop %v1511
      %v1513 = vmul.f32 %v1465, 1.442695
      %v1514 = vpow.pop %v1513
      %v1515 = vmul.f32 %v1466, 1.442695
      %v1516 = vpow.pop %v1515
      %v1517 = vmul.f32 %v1467, 1.442695
      %v1518 = vpow.pop %v1517
      %v1519 = vmul.f32 %v1468, 1.442695
      %v1520 = vpow.pop %v1519
      %v1521 = vmul.f32 %v1469, 1.442695
      %v1522 = vpow.pop %v1521
      %v1523 = vmul.f32 %v1470, 1.442695
      %v1524 = vpow.pop %v1523
      %v1525 = vmul.f32 %v1471, 1.442695
      %v1526 = vpow.pop %v1525
      %v1527 = vmul.f32 %v1472, 1.442695
      %v1528 = vpow.pop %v1527
      %v1529 = vmul.f32 %v1473, 1.442695
      %v1530 = vpow.pop %v1529
      %v1531 = vmul.f32 %v1474, 1.442695
      %v1532 = vpow.pop %v1531
      %v1533 = vmul.f32 %v1475, 1.442695
      %v1534 = vpow.pop %v1533
      %v1535 = vmul.f32 %v1476, 1.442695
      %v1536 = vpow.pop %v1535
      %v1537 = vmul.f32 %v1477, 1.442695
      %v1538 = vpow.pop %v1537
      %v1539 = vmul.f32 %v1478, 1.442695
      %v1540 = vpow.pop %v1539
      %v1541 = vmul.f32 %v1479, 1.442695
      %v1542 = vpow.pop %v1541
      %v1543 = vmul.f32 %v1480, 1.442695
      %v1544 = vpow.pop %v1543
      %v1545 = vmul.f32 %v1418, 0.0
      %v1546 = vmul.f32 %v1420, 0.0
      %v1547 = vmul.f32 %v1422, 0.0
      %v1548 = vmul.f32 %v1424, 0.0
      %v1549 = vmul.f32 %v1426, 0.0
      %v1550 = vmul.f32 %v1428, 0.0
      %v1551 = vmul.f32 %v1430, 0.0
      %v1552 = vmul.f32 %v1432, 0.0
      %v1553 = vmul.f32 %v1434, 0.0
      %v1554 = vmul.f32 %v1436, 0.0
      %v1555 = vmul.f32 %v1438, 0.0
      %v1556 = vmul.f32 %v1440, 0.0
      %v1557 = vmul.f32 %v1442, 0.0
      %v1558 = vmul.f32 %v1444, 0.0
      %v1559 = vmul.f32 %v1446, 0.0
      %v1560 = vmul.f32 %v1448, 0.0
      %v1561 = vadd.f32 %v1482, %v1484
      %1562 = vadd.xlane.f32.xlu0 %v1561
      %v1563 = vpop.xlane.xlu0 %1562
      %v1564 = vadd.f32 %v1486, %v1488
      %1565 = vadd.xlane.f32.xlu0 %v1564
      %v1566 = vpop.xlane.xlu0 %1565
      %v1567 = vadd.f32 %v1490, %v1492
      %1568 = vadd.xlane.f32.xlu0 %v1567
      %v1569 = vpop.xlane.xlu0 %1568
      %v1570 = vadd.f32 %v1494, %v1496
      %1571 = vadd.xlane.f32.xlu0 %v1570
      %v1572 = vpop.xlane.xlu0 %1571
      %v1573 = vadd.f32 %v1498, %v1500
      %1574 = vadd.xlane.f32.xlu0 %v1573
      %v1575 = vpop.xlane.xlu0 %1574
      %v1576 = vadd.f32 %v1502, %v1504
      %1577 = vadd.xlane.f32.xlu0 %v1576
      %v1578 = vpop.xlane.xlu0 %1577
      %v1579 = vadd.f32 %v1506, %v1508
      %1580 = vadd.xlane.f32.xlu0 %v1579
      %v1581 = vpop.xlane.xlu0 %1580
      %v1582 = vadd.f32 %v1510, %v1512
      %1583 = vadd.xlane.f32.xlu0 %v1582
      %v1584 = vpop.xlane.xlu0 %1583
      %v1585 = vadd.f32 %v1514, %v1516
      %1586 = vadd.xlane.f32.xlu0 %v1585
      %v1587 = vpop.xlane.xlu0 %1586
      %v1588 = vadd.f32 %v1518, %v1520
      %1589 = vadd.xlane.f32.xlu0 %v1588
      %v1590 = vpop.xlane.xlu0 %1589
      %v1591 = vadd.f32 %v1522, %v1524
      %1592 = vadd.xlane.f32.xlu0 %v1591
      %v1593 = vpop.xlane.xlu0 %1592
      %v1594 = vadd.f32 %v1526, %v1528
      %1595 = vadd.xlane.f32.xlu0 %v1594
      %v1596 = vpop.xlane.xlu0 %1595
      %v1597 = vadd.f32 %v1530, %v1532
      %1598 = vadd.xlane.f32.xlu0 %v1597
      %v1599 = vpop.xlane.xlu0 %1598
      %v1600 = vadd.f32 %v1534, %v1536
      %1601 = vadd.xlane.f32.xlu0 %v1600
      %v1602 = vpop.xlane.xlu0 %1601
      %v1603 = vadd.f32 %v1538, %v1540
      %1604 = vadd.xlane.f32.xlu0 %v1603
      %v1605 = vpop.xlane.xlu0 %1604
      %v1606 = vadd.f32 %v1542, %v1544
      %1607 = vadd.xlane.f32.xlu0 %v1606
      %v1608 = vpop.xlane.xlu0 %1607
      %v1609 = vadd.f32 %v1545, %v1563
      %v1610 = vadd.f32 %v1546, %v1566
      %v1611 = vadd.f32 %v1547, %v1569
      %v1612 = vadd.f32 %v1548, %v1572
      %v1613 = vadd.f32 %v1549, %v1575
      %v1614 = vadd.f32 %v1550, %v1578
      %v1615 = vadd.f32 %v1551, %v1581
      %v1616 = vadd.f32 %v1552, %v1584
      %v1617 = vadd.f32 %v1553, %v1587
      %v1618 = vadd.f32 %v1554, %v1590
      %v1619 = vadd.f32 %v1555, %v1593
      %v1620 = vadd.f32 %v1556, %v1596
      %v1621 = vadd.f32 %v1557, %v1599
      %v1622 = vadd.f32 %v1558, %v1602
      %v1623 = vadd.f32 %v1559, %v1605
      %v1624 = vadd.f32 %v1560, %v1608
      %v1625 = vpack.c.bf16 %v1486, %v1482
      %v1626 = vpack.c.bf16 %v1488, %v1484
      %v1627 = vpack.c.bf16 %v1494, %v1490
      %v1628 = vpack.c.bf16 %v1496, %v1492
      %v1629 = vpack.c.bf16 %v1502, %v1498
      %v1630 = vpack.c.bf16 %v1504, %v1500
      %v1631 = vpack.c.bf16 %v1510, %v1506
      %v1632 = vpack.c.bf16 %v1512, %v1508
      %v1633 = vpack.c.bf16 %v1518, %v1514
      %v1634 = vpack.c.bf16 %v1520, %v1516
      %v1635 = vpack.c.bf16 %v1526, %v1522
      %v1636 = vpack.c.bf16 %v1528, %v1524
      %v1637 = vpack.c.bf16 %v1534, %v1530
      %v1638 = vpack.c.bf16 %v1536, %v1532
      %v1639 = vpack.c.bf16 %v1542, %v1538
      %v1640 = vpack.c.bf16 %v1544, %v1540
      %1641 = vmatprep.subr.bf16.mxu0 0
      %1642 = vmatpush1.bf16.msra.mxu0 %v1224
      %1643 = vmatprep.subr.bf16.mxu0 0
      %1644 = vmatpush1.bf16.msra.mxu0 %v1225
      %1645 = vmatprep.subr.bf16.mxu0 0
      %1646 = vmatpush1.bf16.msra.mxu0 %v1226
      %1647 = vmatprep.subr.bf16.mxu0 0
      %1648 = vmatpush1.bf16.msra.mxu0 %v1227
      %1649 = vmatprep.subr.bf16.mxu0 0
      %1650 = vmatpush1.bf16.msra.mxu0 %v1228
      %1651 = vmatprep.subr.bf16.mxu0 0
      %1652 = vmatpush1.bf16.msra.mxu0 %v1229
      %1653 = vmatprep.subr.bf16.mxu0 0
      %1654 = vmatpush1.bf16.msra.mxu0 %v1230
      %1655 = vmatprep.subr.bf16.mxu0 0
      %1656 = vmatpush1.bf16.msra.mxu0 %v1231
      %1657 = vmatprep.subr.bf16.mxu0 0
      %1658 = vmatpush1.bf16.msra.mxu0 %v1232
      %1659 = vmatprep.subr.bf16.mxu0 0
      %1660 = vmatpush1.bf16.msra.mxu0 %v1233
      %1661 = vmatprep.subr.bf16.mxu0 0
      %1662 = vmatpush1.bf16.msra.mxu0 %v1234
      %1663 = vmatprep.subr.bf16.mxu0 0
      %1664 = vmatpush1.bf16.msra.mxu0 %v1235
      %1665 = vmatprep.subr.bf16.mxu0 0
      %1666 = vmatpush1.bf16.msra.mxu0 %v1236
      %1667 = vmatprep.subr.bf16.mxu0 0
      %1668 = vmatpush1.bf16.msra.mxu0 %v1237
      %1669 = vmatprep.subr.bf16.mxu0 0
      %1670 = vmatpush1.bf16.msra.mxu0 %v1238
      %1671 = vmatprep.subr.bf16.mxu0 0
      %1672 = vmatpush1.bf16.msra.mxu0 %v1239
      %1673 = vmatprep.mubr.bf16.mxu0 %v1626
      %1674 = vmatmul.mubr.bf16.gmra.mrb[0].mxu0 %v1625
      %v1675 = vpop.f32.mrb[0].mxu0
      %v1676 = vadd.f32 0.0, %v1675
      %v1677 = vpop.f32.mrb[0].mxu0
      %v1678 = vpop.f32.mrb[0].mxu0
      %v1679 = vadd.f32 0.0, %v1678
      %v1680 = vpop.f32.mrb[0].mxu0
      %1681 = vmatprep.mubr.bf16.mxu0 %v1628
      %1682 = vmatmul.mubr.bf16.gmra.mrb[0].mxu0 %v1627
      %v1683 = vpop.f32.mrb[0].mxu0
      %v1684 = vadd.f32 0.0, %v1683
      %v1685 = vpop.f32.mrb[0].mxu0
      %v1686 = vpop.f32.mrb[0].mxu0
      %v1687 = vadd.f32 0.0, %v1686
      %v1688 = vpop.f32.mrb[0].mxu0
      %1689 = vmatprep.mubr.bf16.mxu0 %v1630
      %1690 = vmatmul.mubr.bf16.gmra.mrb[0].mxu0 %v1629
      %v1691 = vpop.f32.mrb[0].mxu0
      %v1692 = vadd.f32 0.0, %v1691
      %v1693 = vpop.f32.mrb[0].mxu0
      %v1694 = vpop.f32.mrb[0].mxu0
      %v1695 = vadd.f32 0.0, %v1694
      %v1696 = vpop.f32.mrb[0].mxu0
      %1697 = vmatprep.mubr.bf16.mxu0 %v1632
      %1698 = vmatmul.mubr.bf16.gmra.mrb[0].mxu0 %v1631
      %v1699 = vpop.f32.mrb[0].mxu0
      %v1700 = vadd.f32 0.0, %v1699
      %v1701 = vpop.f32.mrb[0].mxu0
      %v1702 = vpop.f32.mrb[0].mxu0
      %v1703 = vadd.f32 0.0, %v1702
      %v1704 = vpop.f32.mrb[0].mxu0
      %1705 = vmatprep.mubr.bf16.mxu0 %v1634
      %1706 = vmatmul.mubr.bf16.gmra.mrb[0].mxu0 %v1633
      %v1707 = vpop.f32.mrb[0].mxu0
      %v1708 = vadd.f32 0.0, %v1707
      %v1709 = vpop.f32.mrb[0].mxu0
      %v1710 = vpop.f32.mrb[0].mxu0
      %v1711 = vadd.f32 0.0, %v1710
      %v1712 = vpop.f32.mrb[0].mxu0
      %1713 = vmatprep.mubr.bf16.mxu0 %v1636
      %1714 = vmatmul.mubr.bf16.gmra.mrb[0].mxu0 %v1635
      %v1715 = vpop.f32.mrb[0].mxu0
      %v1716 = vadd.f32 0.0, %v1715
      %v1717 = vpop.f32.mrb[0].mxu0
      %v1718 = vpop.f32.mrb[0].mxu0
      %v1719 = vadd.f32 0.0, %v1718
      %v1720 = vpop.f32.mrb[0].mxu0
      %1721 = vmatprep.mubr.bf16.mxu0 %v1638
      %1722 = vmatmul.mubr.bf16.gmra.mrb[0].mxu0 %v1637
      %v1723 = vpop.f32.mrb[0].mxu0
      %v1724 = vadd.f32 0.0, %v1723
      %v1725 = vpop.f32.mrb[0].mxu0
      %v1726 = vpop.f32.mrb[0].mxu0
      %v1727 = vadd.f32 0.0, %v1726
      %v1728 = vpop.f32.mrb[0].mxu0
      %1729 = vmatprep.mubr.bf16.mxu0 %v1640
      %1730 = vmatmul.mubr.bf16.gmra.mrb[0].mxu0 %v1639
      %v1731 = vpop.f32.mrb[0].mxu0
      %v1732 = vadd.f32 0.0, %v1731
      %v1733 = vpop.f32.mrb[0].mxu0
      %v1734 = vpop.f32.mrb[0].mxu0
      %v1735 = vadd.f32 0.0, %v1734
      %v1736 = vpop.f32.mrb[0].mxu0
      %1737 = vdwg.mxu0
      %v1738 = vadd.f32 %v1545, %v1676
      %v1739 = vadd.f32 %v1546, %v1679
      %v1740 = vadd.f32 %v1547, %v1684
      %v1741 = vadd.f32 %v1548, %v1687
      %v1742 = vadd.f32 %v1549, %v1692
      %v1743 = vadd.f32 %v1550, %v1695
      %v1744 = vadd.f32 %v1551, %v1700
      %v1745 = vadd.f32 %v1552, %v1703
      %v1746 = vadd.f32 %v1553, %v1708
      %v1747 = vadd.f32 %v1554, %v1711
      %v1748 = vadd.f32 %v1555, %v1716
      %v1749 = vadd.f32 %v1556, %v1719
      %v1750 = vadd.f32 %v1557, %v1724
      %v1751 = vadd.f32 %v1558, %v1727
      %v1752 = vadd.f32 %v1559, %v1732
      %v1753 = vadd.f32 %v1560, %v1735
      %v1754 = vrcp.pop %v1609
      %v1755 = vrcp.pop %v1610
      %v1756 = vrcp.pop %v1611
      %v1757 = vrcp.pop %v1612
      %v1758 = vrcp.pop %v1613
      %v1759 = vrcp.pop %v1614
      %v1760 = vrcp.pop %v1615
      %v1761 = vrcp.pop %v1616
      %v1762 = vrcp.pop %v1617
      %v1763 = vrcp.pop %v1618
      %v1764 = vrcp.pop %v1619
      %v1765 = vrcp.pop %v1620
      %v1766 = vrcp.pop %v1621
      %v1767 = vrcp.pop %v1622
      %v1768 = vrcp.pop %v1623
      %v1769 = vrcp.pop %v1624
      %v1770 = vmul.f32 %v1738, %v1754
      %v1771 = vmul.f32 %v1739, %v1755
      %v1772 = vmul.f32 %v1740, %v1756
      %v1773 = vmul.f32 %v1741, %v1757
      %v1774 = vmul.f32 %v1742, %v1758
      %v1775 = vmul.f32 %v1743, %v1759
      %v1776 = vmul.f32 %v1744, %v1760
      %v1777 = vmul.f32 %v1745, %v1761
      %v1778 = vmul.f32 %v1746, %v1762
      %v1779 = vmul.f32 %v1747, %v1763
      %v1780 = vmul.f32 %v1748, %v1764
      %v1781 = vmul.f32 %v1749, %v1765
      %v1782 = vmul.f32 %v1750, %v1766
      %v1783 = vmul.f32 %v1751, %v1767
      %v1784 = vmul.f32 %v1752, %v1768
      %v1785 = vmul.f32 %v1753, %v1769
      %v1786 = vadd.f32 %v1770, %v1124
      %v1787 = vadd.f32 %v1771, %v1128
      %v1788 = vadd.f32 %v1772, %v1134
      %v1789 = vadd.f32 %v1773, %v1138
      %v1790 = vadd.f32 %v1774, %v1144
      %v1791 = vadd.f32 %v1775, %v1148
      %v1792 = vadd.f32 %v1776, %v1154
      %v1793 = vadd.f32 %v1777, %v1158
      %v1794 = vadd.f32 %v1778, %v1164
      %v1795 = vadd.f32 %v1779, %v1168
      %v1796 = vadd.f32 %v1780, %v1174
      %v1797 = vadd.f32 %v1781, %v1178
      %v1798 = vadd.f32 %v1782, %v1184
      %v1799 = vadd.f32 %v1783, %v1188
      %v1800 = vadd.f32 %v1784, %v1194
      %v1801 = vadd.f32 %v1785, %v1198
      %v1802 = vpack.c.bf16 %v1787, %v1786
      %v1803 = vpack.c.bf16 %v1789, %v1788
      %v1804 = vpack.c.bf16 %v1791, %v1790
      %v1805 = vpack.c.bf16 %v1793, %v1792
      %v1806 = vpack.c.bf16 %v1795, %v1794
      %v1807 = vpack.c.bf16 %v1797, %v1796
      %v1808 = vpack.c.bf16 %v1799, %v1798
      %v1809 = vpack.c.bf16 %v1801, %v1800
      %v1810 = vld [vmem:[%s6] sm:$0xf]
      %v1811 = vld [vmem:[%s6 + $0x4] sm:$0xf]
      %v1812 = vld [vmem:[%s6 + $0x8] sm:$0xf]
      %v1813 = vld [vmem:[%s6 + $0xc] sm:$0xf]
      %v1814 = vld [vmem:[%s6 + $0x10] sm:$0xf]
      %v1815 = vld [vmem:[%s6 + $0x14] sm:$0xf]
      %v1816 = vld [vmem:[%s6 + $0x18] sm:$0xf]
      %v1817 = vld [vmem:[%s6 + $0x1c] sm:$0xf]
      %v1818 = vld [vmem:[%s6 + $0x20] sm:$0xf]
      %v1819 = vld [vmem:[%s6 + $0x24] sm:$0xf]
      %v1820 = vld [vmem:[%s6 + $0x28] sm:$0xf]
      %v1821 = vld [vmem:[%s6 + $0x2c] sm:$0xf]
      %v1822 = vld [vmem:[%s6 + $0x30] sm:$0xf]
      %v1823 = vld [vmem:[%s6 + $0x34] sm:$0xf]
      %v1824 = vld [vmem:[%s6 + $0x38] sm:$0xf]
      %v1825 = vld [vmem:[%s6 + $0x3c] sm:$0xf]
      %v1826 = vld [vmem:[%s7] sm:$0x1]
      %v1828 = vlaneseq
      %v1829 = vshrl.u32 %v1828, 7
      %v1830 = vsub.s32 0, %v1829
      %v1831 = vrot.slane %v1826, %v1830
      %v1849 = vunpack.c.l.b16 %v1810
      %v1850 = vunpack.c.l.b16 %v1811
      %v1851 = vunpack.c.l.b16 %v1812
      %v1852 = vunpack.c.l.b16 %v1813
      %v1853 = vunpack.c.l.b16 %v1814
      %v1854 = vunpack.c.l.b16 %v1815
      %v1855 = vunpack.c.l.b16 %v1816
      %v1856 = vunpack.c.l.b16 %v1817
      %v1857 = vunpack.c.l.b16 %v1818
      %v1858 = vunpack.c.l.b16 %v1819
      %v1859 = vunpack.c.l.b16 %v1820
      %v1860 = vunpack.c.l.b16 %v1821
      %v1861 = vunpack.c.l.b16 %v1822
      %v1862 = vunpack.c.l.b16 %v1823
      %v1863 = vunpack.c.l.b16 %v1824
      %v1864 = vunpack.c.l.b16 %v1825
      %v1865 = vpack.c.b16 %v1850, %v1849
      %v1866 = vpack.c.b16 %v1852, %v1851
      %v1867 = vpack.c.b16 %v1854, %v1853
      %v1868 = vpack.c.b16 %v1856, %v1855
      %v1869 = vpack.c.b16 %v1858, %v1857
      %v1870 = vpack.c.b16 %v1860, %v1859
      %v1871 = vpack.c.b16 %v1862, %v1861
      %v1872 = vpack.c.b16 %v1864, %v1863
      %1881 = vmatprep.subr.bf16.mxu0 0
      %1882 = vmatpush1.bf16.msra.mxu0 %v1865
      %1883 = vmatprep.subr.bf16.mxu0 0
      %1884 = vmatpush1.bf16.msra.mxu0 %v1866
      %1885 = vmatprep.subr.bf16.mxu0 0
      %1886 = vmatpush1.bf16.msra.mxu0 %v1867
      %1887 = vmatprep.subr.bf16.mxu0 0
      %1888 = vmatpush1.bf16.msra.mxu0 %v1868
      %1889 = vmatprep.subr.bf16.mxu0 0
      %1890 = vmatpush1.bf16.msra.mxu0 %v1869
      %1891 = vmatprep.subr.bf16.mxu0 0
      %1892 = vmatpush1.bf16.msra.mxu0 %v1870
      %1893 = vmatprep.subr.bf16.mxu0 0
      %1894 = vmatpush1.bf16.msra.mxu0 %v1871
      %1895 = vmatprep.subr.bf16.mxu0 0
      %1896 = vmatpush1.bf16.msra.mxu0 %v1872
      %1897 = vmatprep.subr.bf16.mxu0 0
      %1898 = vmatpush1.bf16.msra.mxu0 0
      %1899 = vmatprep.subr.bf16.mxu0 0
      %1900 = vmatpush1.bf16.msra.mxu0 0
      %1901 = vmatprep.subr.bf16.mxu0 0
      %1902 = vmatpush1.bf16.msra.mxu0 0
      %1903 = vmatprep.subr.bf16.mxu0 0
      %1904 = vmatpush1.bf16.msra.mxu0 0
      %1905 = vmatprep.subr.bf16.mxu0 0
      %1906 = vmatpush1.bf16.msra.mxu0 0
      %1907 = vmatprep.subr.bf16.mxu0 0
      %1908 = vmatpush1.bf16.msra.mxu0 0
      %1909 = vmatprep.subr.bf16.mxu0 0
      %1910 = vmatpush1.bf16.msra.mxu0 0
      %1911 = vmatprep.subr.bf16.mxu0 0
      %1912 = vmatpush1.bf16.msra.mxu0 0
      %1913 = vmatprep.mubr.bf16.mxu0 0
      %1914 = vmatmul.mubr.bf16.gmra.mrb[0].mxu0 %v1802
      %v1915 = vpop.f32.mrb[0].mxu0
      %v1916 = vadd.f32 %v1831, %v1915
      %v1917 = vpop.f32.mrb[0].mxu0
      %v1918 = vpop.f32.mrb[0].mxu0
      %v1919 = vadd.f32 %v1831, %v1918
      %v1920 = vpop.f32.mrb[0].mxu0
      %1921 = vmatprep.mubr.bf16.mxu0 0
      %1922 = vmatmul.mubr.bf16.gmra.mrb[0].mxu0 %v1803
      %v1923 = vpop.f32.mrb[0].mxu0
      %v1924 = vadd.f32 %v1831, %v1923
      %v1925 = vpop.f32.mrb[0].mxu0
      %v1926 = vpop.f32.mrb[0].mxu0
      %v1927 = vadd.f32 %v1831, %v1926
      %v1928 = vpop.f32.mrb[0].mxu0
      %1929 = vmatprep.mubr.bf16.mxu0 0
      %1930 = vmatmul.mubr.bf16.gmra.mrb[0].mxu0 %v1804
      %v1931 = vpop.f32.mrb[0].mxu0
      %v1932 = vadd.f32 %v1831, %v1931
      %v1933 = vpop.f32.mrb[0].mxu0
      %v1934 = vpop.f32.mrb[0].mxu0
      %v1935 = vadd.f32 %v1831, %v1934
      %v1936 = vpop.f32.mrb[0].mxu0
      %1937 = vmatprep.mubr.bf16.mxu0 0
      %1938 = vmatmul.mubr.bf16.gmra.mrb[0].mxu0 %v1805
      %v1939 = vpop.f32.mrb[0].mxu0
      %v1940 = vadd.f32 %v1831, %v1939
      %v1941 = vpop.f32.mrb[0].mxu0
      %v1942 = vpop.f32.mrb[0].mxu0
      %v1943 = vadd.f32 %v1831, %v1942
      %v1944 = vpop.f32.mrb[0].mxu0
      %1945 = vmatprep.mubr.bf16.mxu0 0
      %1946 = vmatmul.mubr.bf16.gmra.mrb[0].mxu0 %v1806
      %v1947 = vpop.f32.mrb[0].mxu0
      %v1948 = vadd.f32 %v1831, %v1947
      %v1949 = vpop.f32.mrb[0].mxu0
      %v1950 = vpop.f32.mrb[0].mxu0
      %v1951 = vadd.f32 %v1831, %v1950
      %v1952 = vpop.f32.mrb[0].mxu0
      %1953 = vmatprep.mubr.bf16.mxu0 0
      %1954 = vmatmul.mubr.bf16.gmra.mrb[0].mxu0 %v1807
      %v1955 = vpop.f32.mrb[0].mxu0
      %v1956 = vadd.f32 %v1831, %v1955
      %v1957 = vpop.f32.mrb[0].mxu0
      %v1958 = vpop.f32.mrb[0].mxu0
      %v1959 = vadd.f32 %v1831, %v1958
      %v1960 = vpop.f32.mrb[0].mxu0
      %1961 = vmatprep.mubr.bf16.mxu0 0
      %1962 = vmatmul.mubr.bf16.gmra.mrb[0].mxu0 %v1808
      %v1963 = vpop.f32.mrb[0].mxu0
      %v1964 = vadd.f32 %v1831, %v1963
      %v1965 = vpop.f32.mrb[0].mxu0
      %v1966 = vpop.f32.mrb[0].mxu0
      %v1967 = vadd.f32 %v1831, %v1966
      %v1968 = vpop.f32.mrb[0].mxu0
      %1969 = vmatprep.mubr.bf16.mxu0 0
      %1970 = vmatmul.mubr.bf16.gmra.mrb[0].mxu0 %v1809
      %v1971 = vpop.f32.mrb[0].mxu0
      %v1972 = vadd.f32 %v1831, %v1971
      %v1973 = vpop.f32.mrb[0].mxu0
      %v1974 = vpop.f32.mrb[0].mxu0
      %v1975 = vadd.f32 %v1831, %v1974
      %v1976 = vpop.f32.mrb[0].mxu0
      %1977 = vdwg.mxu0
      %1978 = vst.msk [vmem:[%s363] sm:$0xff] %vm953, %v1916
      %1979 = vst.msk [vmem:[%s363 + $0x8] sm:$0xff] %vm953, %v1919
      %1980 = vst.msk [vmem:[%s363 + $0x10] sm:$0xff] %vm953, %v1924
      %1981 = vst.msk [vmem:[%s363 + $0x18] sm:$0xff] %vm953, %v1927
      %1982 = vst.msk [vmem:[%s363 + $0x20] sm:$0xff] %vm953, %v1932
      %1983 = vst.msk [vmem:[%s363 + $0x28] sm:$0xff] %vm953, %v1935
      %1984 = vst.msk [vmem:[%s363 + $0x30] sm:$0xff] %vm953, %v1940
      %1985 = vst.msk [vmem:[%s363 + $0x38] sm:$0xff] %vm953, %v1943
      %1986 = vst.msk [vmem:[%s363 + $0x40] sm:$0xff] %vm953, %v1948
      %1987 = vst.msk [vmem:[%s363 + $0x48] sm:$0xff] %vm953, %v1951
      %1988 = vst.msk [vmem:[%s363 + $0x50] sm:$0xff] %vm953, %v1956
      %1989 = vst.msk [vmem:[%s363 + $0x58] sm:$0xff] %vm953, %v1959
      %1990 = vst.msk [vmem:[%s363 + $0x60] sm:$0xff] %vm953, %v1964
      %1991 = vst.msk [vmem:[%s363 + $0x68] sm:$0xff] %vm953, %v1967
      %1992 = vst.msk [vmem:[%s363 + $0x70] sm:$0xff] %vm953, %v1972
      %1993 = vst.msk [vmem:[%s363 + $0x78] sm:$0xff] %vm953, %v1975
      %s1994 = smul.u32 16, %s24
      %p1995 = scmp.lt.s32.totalorder %s23, 1
      %s1996 = scalar_select %p1995, %s23, 1
      %p1997 = scmp.lt.s32.totalorder %s1994, 31
      %s1998 = scalar_select %p1997, %s1994, 31
      %s1999 = smul.addr %s1996, 32
      %s2000 = sadd.s32 %s1998, %s1999
      %s2001 = smul.addr %s2000, 8
      %s2002 = scalar_lea.vmem %s8, %s2001
      // Predicated region
      $region57: #{tpu_custom_call.1} parent=51 // pred_check
        %p2003 = pneg %p231
      $region58: #{tpu_custom_call.1} parent=51 // pred_check_branch
        %2005 = sbr.rel (%p2003) target = $region60
      $region59: #{tpu_custom_call.1} parent=51 // pred_region
        %s2006 = smul.u32 16, %s24
      $region60: #{tpu_custom_call.1} parent=51 // pred_fallthru
        _
    $region52: #{tpu_custom_call.1} parent=5 // pred_fallthru
      _
    %p2007 = scmp.le.s32.totalorder 2, %s14
    // Predicated region
    $region61: #{tpu_custom_call.1} parent=5 // pred_check
      %p2008 = pneg %p2007
    $region62: #{tpu_custom_call.1} parent=5 // pred_check_branch
      %2010 = sbr.rel (%p2008) target = $region64
    $region63: #{tpu_custom_call.1} parent=5 // pred_region
      %s2011 = ssub.s32 %s14, 2
      // Predicated region
      $region65: #{tpu_custom_call.1} parent=63 // pred_check
        %p2012 = pneg %p237
      $region66: #{tpu_custom_call.1} parent=63 // pred_check_branch
        %2014 = sbr.rel (%p2012) target = $region68
      $region67: #{tpu_custom_call.1} parent=63 // pred_region
        %s2015 = smul.u32 16, %s26
        %p2016 = scmp.lt.s32.totalorder %s25, 1
        %s2017 = scalar_select %p2016, %s25, 1
        %p2018 = scmp.lt.s32.totalorder %s2015, 31
        %s2019 = scalar_select %p2018, %s2015, 31
        %s2020 = smul.addr %s2017, 32
        %s2021 = sadd.s32 %s2019, %s2020
        %s2022 = smul.addr %s2021, 8
        %s2023 = scalar_lea.vmem %s8, %s2022
      $region68: #{tpu_custom_call.1} parent=63 // pred_fallthru
        _
    $region64: #{tpu_custom_call.1} parent=5 // pred_fallthru
      _
  $region6: #{tpu_custom_call.1} parent=0 // loop_footer
    %s18 = sadd.s32 1, %s14
  $region7: #{tpu_custom_call.1} parent=0 // loop_footer_branch
    %13 = sbr.rel target = $region3
  $region8: #{tpu_custom_call.1} parent=0 // loop_exit
    _

</llo_original>
